<compile_context>
chip_gen: v6e
topology: v6e:2x2x1
jax: 0.10.0
libtpu: 0.0.40
codegen_flags: <defaults>
</compile_context>

<pallas_src>
import numpy as np
import jax
import jax.numpy as jnp
from jax.experimental import pallas as pl
from jax.experimental.pallas import tpu as pltpu


# ----------------------------------------------------------------------------
# Cross-generation VMEM sizing.
#   Working set = 2 (double buffer) * NH*TI*TJ*out_bytes + TI*TJ*4 (base)
#   Keep it under ~36 MiB so it fits v7x (64 MiB physical per TC) with
#   headroom; vmem_limit_bytes raises v5e/v6e/v7x scoped defaults to cover it.
# ----------------------------------------------------------------------------
_VMEM_WORKSET_BUDGET = 36 * 1024 * 1024
_VMEM_LIMIT_BYTES = 48 * 1024 * 1024
_TI_CAP = 256
_TJ_CAP = 2048


def _round_down(x: int, m: int) -> int:
    return (x // m) * m


def _pick_dim(L: int, cap: int, align: int) -> int:
    """Largest block dim <= cap that is a multiple of `align`, or the full
    extent when L < align (full-extent blocks are always legal)."""
    if L < align:
        return L
    return max(align, min(cap, _round_down(L, align)))


def _fit_tiles(L: int, NH: int, out_itemsize: int):
    """Pick (TI, TJ) so the double-buffered output blocks + base scratch fit
    the cross-generation VMEM budget.  Lane dim (TJ) is shrunk first."""
    align_i = max(8, 32 // out_itemsize)      # 8 for f32, 16 for bf16, 32 for i8
    align_j = 128
    TI = _pick_dim(L, _TI_CAP, align_i)
    TJ = _pick_dim(L, _TJ_CAP, align_j)

    def workset(ti, tj):
        return 2 * NH * ti * tj * out_itemsize + ti * tj * 4

    while workset(TI, TJ) > _VMEM_WORKSET_BUDGET:
        if TJ > align_j:
            TJ = max(align_j, _round_down(TJ // 2, align_j))
        elif TI > align_i:
            TI = max(align_i, _round_down(TI // 2, align_i))
        else:
            break
    return TI, TJ


# ----------------------------------------------------------------------------
# Glue: bilinear resize == F.interpolate(mode='bilinear', align_corners=False)
# expressed as two small interpolation matrices (exact, separable).
# ----------------------------------------------------------------------------
def _interp_matrix(out_size: int, in_size: int) -> jnp.ndarray:
    o = jnp.arange(out_size, dtype=jnp.float32)
    src = (o + 0.5) * (in_size / out_size) - 0.5
    i0 = jnp.floor(src)
    frac = src - i0
    i0c = jnp.clip(i0, 0, in_size - 1).astype(jnp.int32)
    i1c = jnp.clip(i0 + 1.0, 0, in_size - 1).astype(jnp.int32)
    rows = jnp.arange(out_size)
    m = jnp.zeros((out_size, in_size), jnp.float32)
    m = m.at[rows, i0c].add(1.0 - frac)
    m = m.at[rows, i1c].add(frac)
    return m


def bilinear_resize_nchw(x: jnp.ndarray, H: int, W: int) -> jnp.ndarray:
    _, _, hin, win = x.shape
    rh = _interp_matrix(H, hin)
    rw = _interp_matrix(W, win)
    return jnp.einsum("yi,bciw,xw->bcyx", rh, x, rw)


# ----------------------------------------------------------------------------
# sin/cos positional tables — O(L*A), A=16 lanes: cheaper as plain XLA than a
# Pallas kernel with masked partial stores; fuses with downstream consumers.
# ----------------------------------------------------------------------------
def geo_prior_sincos(angle, H, W):
    L = H * W
    idx = jnp.arange(L, dtype=jnp.float32)
    theta = idx[:, None] * angle[None, :].astype(jnp.float32)
    return jnp.sin(theta).reshape(H, W, -1), jnp.cos(theta).reshape(H, W, -1)


# ----------------------------------------------------------------------------
# Pallas kernel: tiled geo-prior decay mask, all heads per grid step.
#   out[b, h, i, j] = (w0*(|ri-rj|+|ci-cj|) + w1*|d[b,i]-d[b,j]|) * decay[h]
# ----------------------------------------------------------------------------
def _mask_kernel(weight_ref, decay_ref, rowdata_ref, coldata_ref, out_ref, base_ref):
    # Head-invariant base tile.
    w0 = weight_ref[0]
    w1 = weight_ref[1]
    rd = rowdata_ref[0]                               # (3, TJ): [row; col; depth]  (j view)
    cd = coldata_ref[0]                               # (TI, 3): same data, i view
    rj, cj, dj = rd[0:1, :], rd[1:2, :], rd[2:3, :]   # (1, TJ)
    ri, ci, di = cd[:, 0:1], cd[:, 1:2], cd[:, 2:3]   # (TI, 1)
    base_ref[...] = (w0 * (jnp.abs(ri - rj) + jnp.abs(ci - cj))
                     + w1 * jnp.abs(di - dj))

    # Per-head: one SMEM scalar read, one multiply, one lane-dense store.
    # NH is small & static -> short unrolled Python loop (no per-head grid
    # steps, no cross-iteration scratch dependency).
    num_heads = out_ref.shape[1]
    for h in range(num_heads):
        out_ref[0, h] = (base_ref[...] * decay_ref[h]).astype(out_ref.dtype)


def geo_prior_masks(depth_flat, decay, H, W, weight, out_dtype=jnp.float32):
    """depth_flat: (B, L) f32;  decay: (NH,);  returns (B, NH, L, L) out_dtype."""
    B, L = depth_flat.shape
    assert L == H * W
    NH = int(decay.shape[0])
    out_itemsize = np.dtype(out_dtype).itemsize

    TI, TJ = _fit_tiles(L, NH, out_itemsize)
    n_i = pl.cdiv(L, TI)
    n_j = pl.cdiv(L, TJ)

    # O(L) coordinate / depth vectors (no L^2 integer iota in-kernel).
    idx = np.arange(L)
    coords = np.stack([(idx // W).astype(np.float32),
                       (idx % W).astype(np.float32)], axis=0)            # (2, L)
    rowdata = jnp.concatenate(
        [jnp.broadcast_to(jnp.asarray(coords)[None], (B, 2, L)),
         depth_flat.astype(jnp.float32)[:, None, :]], axis=1)            # (B, 3, L)
    coldata = jnp.transpose(rowdata, (0, 2, 1))                          # (B, L, 3)

    w_arr = jnp.asarray(weight, jnp.float32).reshape(2)
    decay_f32 = decay.astype(jnp.float32)

    # Order grid axes by descending extent so the leading "parallel" axis is
    # the largest -> balanced sharding across v7x's 2 TensorCores.
    axes = sorted([("i", n_i), ("j", n_j), ("b", B)], key=lambda t: -t[1])
    grid = tuple(ext for _, ext in axes)
    pos = {name: k for k, (name, _) in enumerate(axes)}

    def out_map(g0, g1, g2):
        g = (g0, g1, g2)
        return (g[pos["b"]], 0, g[pos["i"]], g[pos["j"]])

    def row_map(g0, g1, g2):
        g = (g0, g1, g2)
        return (g[pos["b"]], 0, g[pos["j"]])

    def col_map(g0, g1, g2):
        g = (g0, g1, g2)
        return (g[pos["b"]], g[pos["i"]], 0)

    cost = pl.CostEstimate(
        flops=int(B * L * L * (9 + NH)),
        transcendentals=0,
        bytes_accessed=int(B * NH * L * L * out_itemsize + 2 * B * 3 * L * 4),
    )

    out = pl.pallas_call(
        _mask_kernel,
        out_shape=jax.ShapeDtypeStruct((B, NH, L, L), out_dtype),
        grid=grid,
        in_specs=[
            pl.BlockSpec(memory_space=pltpu.MemorySpace.SMEM),   # weight (2,)
            pl.BlockSpec(memory_space=pltpu.MemorySpace.SMEM),   # decay (NH,)
            pl.BlockSpec((1, 3, TJ), row_map),                   # row-oriented view
            pl.BlockSpec((1, TI, 3), col_map),                   # col-oriented view
        ],
        out_specs=pl.BlockSpec((1, NH, TI, TJ), out_map),
        scratch_shapes=[pltpu.VMEM((TI, TJ), jnp.float32)],
        compiler_params=pltpu.CompilerParams(
            dimension_semantics=("parallel", "parallel", "parallel"),
            vmem_limit_bytes=_VMEM_LIMIT_BYTES),
        cost_estimate=cost,
    )(w_arr, decay_f32, rowdata, coldata)
    return out


# ----------------------------------------------------------------------------
# Full forward (split_or_not=False path)
# ----------------------------------------------------------------------------
def geo_prior_gen_forward(HW_tuple, depth_map, decay, angle, weight=(0.5, 0.5),
                          out_dtype=jnp.float32):
    H, W = HW_tuple
    L = H * W
    depth_r = bilinear_resize_nchw(depth_map, H, W)           # (B, 1, H, W)
    depth_flat = depth_r.reshape(depth_map.shape[0], L)       # C == 1, as in PyTorch

    sin, cos = geo_prior_sincos(angle, H, W)
    mask = geo_prior_masks(depth_flat, decay, H, W, weight, out_dtype=out_dtype)
    return (sin, cos), mask


# ----------------------------------------------------------------------------
# Plain-JAX reference (mirrors the PyTorch module) for verification.
# ----------------------------------------------------------------------------
def reference_forward(HW_tuple, depth_map, decay, angle, weight=(0.5, 0.5)):
    H, W = HW_tuple
    L = H * W
    depth_r = bilinear_resize_nchw(depth_map, H, W)
    B = depth_map.shape[0]

    idx = jnp.arange(L, dtype=jnp.float32)
    sin = jnp.sin(idx[:, None] * angle[None, :]).reshape(H, W, -1)
    cos = jnp.cos(idx[:, None] * angle[None, :]).reshape(H, W, -1)

    ih = jnp.arange(H, dtype=jnp.float32)
    iw = jnp.arange(W, dtype=jnp.float32)
    gh, gw = jnp.meshgrid(ih, iw, indexing="ij")
    grid = jnp.stack([gh, gw], axis=-1).reshape(L, 2)
    mask_pos = jnp.abs(grid[:, None, :] - grid[None, :, :]).sum(-1)
    mask_pos = mask_pos * decay[:, None, None]                        # (NH, L, L)

    d = depth_r.reshape(B, L, 1)
    mask_d = jnp.abs(d[:, :, None, :] - d[:, None, :, :]).sum(-1)     # (B, L, L)
    mask_d = mask_d[:, None, :, :] * decay[None, :, None, None]       # (B, NH, L, L)

    mask = weight[0] * mask_pos[None] + weight[1] * mask_d
    return (sin, cos), mask


if __name__ == "__main__":
    key = jax.random.PRNGKey(0)

    B, C, Hin, Win = 2, 1, 9, 11      # raw depth patches (NCHW, C must be 1)
    num_heads, A = 4, 16              # decay per head, rotary angle dim

    depth_map = jax.random.uniform(key, (B, C, Hin, Win), dtype=jnp.float32)
    decay = jnp.log(1.0 - 2.0 ** (-5.0 - jnp.arange(num_heads, dtype=jnp.float32)))
    angle = 1.0 / (10000.0 ** jnp.linspace(0.0, 1.0, A, dtype=jnp.float32))
    weight = (0.5, 0.5)

    # Case 1: 128-aligned L (16*16 = 256).  Case 2: non-aligned L (24*20 = 480)
    # to exercise the cdiv grid with partial edge blocks (no pad-and-slice).
    for (H, W) in [(16, 16), (24, 20)]:
        (sin, cos), mask = geo_prior_gen_forward((H, W), depth_map, decay, angle, weight)
        jax.block_until_ready(mask)

        (sin_r, cos_r), mask_r = reference_forward((H, W), depth_map, decay, angle, weight)
        np.testing.assert_allclose(np.asarray(sin), np.asarray(sin_r), rtol=1e-5, atol=1e-5)
        np.testing.assert_allclose(np.asarray(cos), np.asarray(cos_r), rtol=1e-5, atol=1e-5)
        np.testing.assert_allclose(np.asarray(mask), np.asarray(mask_r), rtol=1e-5, atol=1e-5)

    # bf16 output path (compute in f32, cast only at the store): halves the
    # HBM write traffic of this write-bound kernel.
    (_, _), mask_bf16 = geo_prior_gen_forward((16, 16), depth_map, decay, angle,
                                              weight, out_dtype=jnp.bfloat16)
    jax.block_until_ready(mask_bf16)
    (_, _), mask_ref = reference_forward((16, 16), depth_map, decay, angle, weight)
    np.testing.assert_allclose(np.asarray(mask_bf16).astype(np.float32),
                               np.asarray(mask_ref), rtol=2e-2, atol=1e-2)

    print("KERNEL_OK")
</pallas_src>

<mosaic_0001>
module attributes {stable_mosaic.version = 11 : i64} {
  func.func @_mask_kernel(%arg0: i32, %arg1: i32, %arg2: i32, %arg3: memref<2xf32, #tpu.memory_space<smem>>, %arg4: memref<4xf32, #tpu.memory_space<smem>>, %arg5: memref<1x3x256xf32, #tpu.memory_space<vmem>>, %arg6: memref<1x256x3xf32, #tpu.memory_space<vmem>>, %arg7: memref<1x4x256x256xf32, #tpu.memory_space<vmem>>, %arg8: memref<256x256xf32, #tpu.memory_space<vmem>>) attributes {dimension_semantics = [#tpu.dimension_semantics<parallel>, #tpu.dimension_semantics<parallel>, #tpu.dimension_semantics<parallel>], iteration_bounds = array<i64: 2, 1, 1>, scalar_prefetch = 0 : i64, scratch_operands = 1 : i64, tpu.core_type = #tpu.core_type<tc>, window_params = [{transform_indices = @transform_0, window_bounds = array<i64: 2>}, {transform_indices = @transform_1, window_bounds = array<i64: 4>}, {transform_indices = @transform_2, window_bounds = array<i64: 1, 3, 256>}, {transform_indices = @transform_3, window_bounds = array<i64: 1, 256, 3>}, {transform_indices = @transform_4, window_bounds = array<i64: 1, 4, 256, 256>}]} {
    %c0 = arith.constant 0 : index
    %0 = memref.load %arg3[%c0] : memref<2xf32, #tpu.memory_space<smem>>
    %c1 = arith.constant 1 : index
    %1 = memref.load %arg3[%c1] : memref<2xf32, #tpu.memory_space<smem>>
    %c0_0 = arith.constant 0 : index
    %c0_1 = arith.constant 0 : index
    %c0_2 = arith.constant 0 : index
    %2 = vector.load %arg5[%c0_0, %c0_1, %c0_2] : memref<1x3x256xf32, #tpu.memory_space<vmem>>, vector<1x3x256xf32>
    %3 = vector.shape_cast %2 : vector<1x3x256xf32> to vector<3x256xf32>
    %c0_3 = arith.constant 0 : index
    %c0_4 = arith.constant 0 : index
    %c0_5 = arith.constant 0 : index
    %4 = vector.load %arg6[%c0_3, %c0_4, %c0_5] : memref<1x256x3xf32, #tpu.memory_space<vmem>>, vector<1x256x3xf32>
    %5 = vector.shape_cast %4 : vector<1x256x3xf32> to vector<256x3xf32>
    %6 = vector.extract_strided_slice %3 {offsets = [0, 0], sizes = [1, 256], strides = [1, 1]} : vector<3x256xf32> to vector<1x256xf32>
    %7 = vector.extract_strided_slice %3 {offsets = [1, 0], sizes = [1, 256], strides = [1, 1]} : vector<3x256xf32> to vector<1x256xf32>
    %8 = vector.extract_strided_slice %3 {offsets = [2, 0], sizes = [1, 256], strides = [1, 1]} : vector<3x256xf32> to vector<1x256xf32>
    %9 = vector.extract_strided_slice %5 {offsets = [0, 0], sizes = [256, 1], strides = [1, 1]} : vector<256x3xf32> to vector<256x1xf32>
    %10 = vector.extract_strided_slice %5 {offsets = [0, 1], sizes = [256, 1], strides = [1, 1]} : vector<256x3xf32> to vector<256x1xf32>
    %11 = vector.extract_strided_slice %5 {offsets = [0, 2], sizes = [256, 1], strides = [1, 1]} : vector<256x3xf32> to vector<256x1xf32>
    %12 = vector.broadcast %9 : vector<256x1xf32> to vector<256x256xf32>
    %13 = vector.broadcast %6 : vector<1x256xf32> to vector<256x256xf32>
    %14 = arith.subf %12, %13 : vector<256x256xf32>
    %15 = math.absf %14 : vector<256x256xf32>
    %16 = vector.broadcast %10 : vector<256x1xf32> to vector<256x256xf32>
    %17 = vector.broadcast %7 : vector<1x256xf32> to vector<256x256xf32>
    %18 = arith.subf %16, %17 : vector<256x256xf32>
    %19 = math.absf %18 : vector<256x256xf32>
    %20 = arith.addf %15, %19 : vector<256x256xf32>
    %21 = vector.broadcast %0 : f32 to vector<256x256xf32>
    %22 = arith.mulf %21, %20 : vector<256x256xf32>
    %23 = vector.broadcast %11 : vector<256x1xf32> to vector<256x256xf32>
    %24 = vector.broadcast %8 : vector<1x256xf32> to vector<256x256xf32>
    %25 = arith.subf %23, %24 : vector<256x256xf32>
    %26 = math.absf %25 : vector<256x256xf32>
    %27 = vector.broadcast %1 : f32 to vector<256x256xf32>
    %28 = arith.mulf %27, %26 : vector<256x256xf32>
    %29 = arith.addf %22, %28 : vector<256x256xf32>
    %c0_6 = arith.constant 0 : index
    %c0_7 = arith.constant 0 : index
    %30 = vector.load %arg8[%c0_6, %c0_7] : memref<256x256xf32, #tpu.memory_space<vmem>>, vector<256x256xf32>
    tpu.vector_store %arg8[%c0_6, %c0_7], %29 {strides = array<i32>} : memref<256x256xf32, #tpu.memory_space<vmem>>, vector<256x256xf32>,
    %c0_8 = arith.constant 0 : index
    %c0_9 = arith.constant 0 : index
    %31 = vector.load %arg8[%c0_8, %c0_9] : memref<256x256xf32, #tpu.memory_space<vmem>>, vector<256x256xf32>
    %c0_10 = arith.constant 0 : index
    %32 = memref.load %arg4[%c0_10] : memref<4xf32, #tpu.memory_space<smem>>
    %33 = vector.broadcast %32 : f32 to vector<256x256xf32>
    %34 = arith.mulf %31, %33 : vector<256x256xf32>
    %c0_11 = arith.constant 0 : index
    %c0_12 = arith.constant 0 : index
    %c0_13 = arith.constant 0 : index
    %c0_14 = arith.constant 0 : index
    %35 = vector.load %arg7[%c0_11, %c0_12, %c0_13, %c0_14] : memref<1x4x256x256xf32, #tpu.memory_space<vmem>>, vector<1x1x256x256xf32>
    %36 = vector.shape_cast %35 : vector<1x1x256x256xf32> to vector<256x256xf32>
    %37 = vector.shape_cast %34 : vector<256x256xf32> to vector<1x1x256x256xf32>
    tpu.vector_store %arg7[%c0_11, %c0_12, %c0_13, %c0_14], %37 {strides = array<i32>} : memref<1x4x256x256xf32, #tpu.memory_space<vmem>>, vector<1x1x256x256xf32>,
    %c0_15 = arith.constant 0 : index
    %c0_16 = arith.constant 0 : index
    %38 = vector.load %arg8[%c0_15, %c0_16] : memref<256x256xf32, #tpu.memory_space<vmem>>, vector<256x256xf32>
    %c1_17 = arith.constant 1 : index
    %39 = memref.load %arg4[%c1_17] : memref<4xf32, #tpu.memory_space<smem>>
    %40 = vector.broadcast %39 : f32 to vector<256x256xf32>
    %41 = arith.mulf %38, %40 : vector<256x256xf32>
    %c0_18 = arith.constant 0 : index
    %c1_19 = arith.constant 1 : index
    %c0_20 = arith.constant 0 : index
    %c0_21 = arith.constant 0 : index
    %42 = vector.load %arg7[%c0_18, %c1_19, %c0_20, %c0_21] : memref<1x4x256x256xf32, #tpu.memory_space<vmem>>, vector<1x1x256x256xf32>
    %43 = vector.shape_cast %42 : vector<1x1x256x256xf32> to vector<256x256xf32>
    %44 = vector.shape_cast %41 : vector<256x256xf32> to vector<1x1x256x256xf32>
    tpu.vector_store %arg7[%c0_18, %c1_19, %c0_20, %c0_21], %44 {strides = array<i32>} : memref<1x4x256x256xf32, #tpu.memory_space<vmem>>, vector<1x1x256x256xf32>,
    %c0_22 = arith.constant 0 : index
    %c0_23 = arith.constant 0 : index
    %45 = vector.load %arg8[%c0_22, %c0_23] : memref<256x256xf32, #tpu.memory_space<vmem>>, vector<256x256xf32>
    %c2 = arith.constant 2 : index
    %46 = memref.load %arg4[%c2] : memref<4xf32, #tpu.memory_space<smem>>
    %47 = vector.broadcast %46 : f32 to vector<256x256xf32>
    %48 = arith.mulf %45, %47 : vector<256x256xf32>
    %c0_24 = arith.constant 0 : index
    %c2_25 = arith.constant 2 : index
    %c0_26 = arith.constant 0 : index
    %c0_27 = arith.constant 0 : index
    %49 = vector.load %arg7[%c0_24, %c2_25, %c0_26, %c0_27] : memref<1x4x256x256xf32, #tpu.memory_space<vmem>>, vector<1x1x256x256xf32>
    %50 = vector.shape_cast %49 : vector<1x1x256x256xf32> to vector<256x256xf32>
    %51 = vector.shape_cast %48 : vector<256x256xf32> to vector<1x1x256x256xf32>
    tpu.vector_store %arg7[%c0_24, %c2_25, %c0_26, %c0_27], %51 {strides = array<i32>} : memref<1x4x256x256xf32, #tpu.memory_space<vmem>>, vector<1x1x256x256xf32>,
    %c0_28 = arith.constant 0 : index
    %c0_29 = arith.constant 0 : index
    %52 = vector.load %arg8[%c0_28, %c0_29] : memref<256x256xf32, #tpu.memory_space<vmem>>, vector<256x256xf32>
    %c3 = arith.constant 3 : index
    %53 = memref.load %arg4[%c3] : memref<4xf32, #tpu.memory_space<smem>>
    %54 = vector.broadcast %53 : f32 to vector<256x256xf32>
    %55 = arith.mulf %52, %54 : vector<256x256xf32>
    %c0_30 = arith.constant 0 : index
    %c3_31 = arith.constant 3 : index
    %c0_32 = arith.constant 0 : index
    %c0_33 = arith.constant 0 : index
    %56 = vector.load %arg7[%c0_30, %c3_31, %c0_32, %c0_33] : memref<1x4x256x256xf32, #tpu.memory_space<vmem>>, vector<1x1x256x256xf32>
    %57 = vector.shape_cast %56 : vector<1x1x256x256xf32> to vector<256x256xf32>
    %58 = vector.shape_cast %55 : vector<256x256xf32> to vector<1x1x256x256xf32>
    tpu.vector_store %arg7[%c0_30, %c3_31, %c0_32, %c0_33], %58 {strides = array<i32>} : memref<1x4x256x256xf32, #tpu.memory_space<vmem>>, vector<1x1x256x256xf32>,
    return
  }
  func.func @transform_0(%arg0: i32, %arg1: i32, %arg2: i32) -> i32 {
    %c0_i32 = arith.constant 0 : i32
    %c0_i32_0 = arith.constant 0 : i32
    return %c0_i32 : i32
  }
  func.func @transform_1(%arg0: i32, %arg1: i32, %arg2: i32) -> i32 {
    %c0_i32 = arith.constant 0 : i32
    %c0_i32_0 = arith.constant 0 : i32
    return %c0_i32 : i32
  }
  func.func @transform_2(%arg0: i32, %arg1: i32, %arg2: i32) -> (i32, i32, i32) {
    %c0_i32 = arith.constant 0 : i32
    %c0_i32_0 = arith.constant 0 : i32
    return %arg0, %c0_i32, %arg2 : i32, i32, i32
  }
  func.func @transform_3(%arg0: i32, %arg1: i32, %arg2: i32) -> (i32, i32, i32) {
    %c0_i32 = arith.constant 0 : i32
    %c0_i32_0 = arith.constant 0 : i32
    return %arg0, %arg1, %c0_i32 : i32, i32, i32
  }
  func.func @transform_4(%arg0: i32, %arg1: i32, %arg2: i32) -> (i32, i32, i32, i32) {
    %c0_i32 = arith.constant 0 : i32
    %c0_i32_0 = arith.constant 0 : i32
    return %arg0, %c0_i32, %arg1, %arg2 : i32, i32, i32, i32
  }
}

</mosaic_0001>

<llo_original>
// kernel: tpu_custom_call.1
$region0: #{tpu_custom_call.1}
  #allocation0 [shape = 'u32[]', space=smem, size = 0x4, offset = 0x4, fixed_abs, tag = 'smem constant byte address 0x4 - core index']
  #allocation1 [shape = 'u32[144,128]{1,0:T(1,128)}', space=vmem, size = 0x12000, scoped, tag = 'internal scratch']
  #allocation2 [shape = 'f32[256,256]{1,0:T(8,128)}', space=vmem, size = 0x40000, scoped, tag = 'scratch operand']
  %s0 = inlined_call_operand.hbm [shape: f32[2], index: 0, kind: input, shape index: {}]
  %s1 = inlined_call_operand.hbm [shape: f32[4], index: 1, kind: input, shape index: {}]
  %s2 = inlined_call_operand.vmem [shape: f32[2,3,256], index: 2, kind: input, shape index: {}]
  %s3 = inlined_call_operand.vmem [shape: f32[2,256,3], index: 3, kind: input, shape index: {}]
  %s4 = inlined_call_operand.hbm [shape: f32[2,4,256,256], index: 4, kind: output, shape index: {}]
  %s5 = sld [smem:[#allocation0]]
  $region57: #{tpu_custom_call.1} parent=0
    _
  %s7 = ssub.s32 1, %s5
  %s8 = scalar_select 0, %s7, %s5
  $region1: #{tpu_custom_call.1} parent=0
    #allocation3 [shape = 'u8[512]{0}', space=smem, size = 0x200, scoped, tag = 'input window, operand 0, single buffered']
    #allocation4 [shape = 's32[2]{0}', space=sflag, size = 0x8, scoped, tag = 'scoped memory for tpu_custom_call.1']
    #allocation5 [shape = 's32[2]{0}', space=sflag, size = 0x8, scoped, tag = 'scoped memory for tpu_custom_call.1']
    #allocation6 [shape = 'u8[512]{0}', space=smem, size = 0x200, scoped, tag = 'input window, operand 1, single buffered']
    #allocation7 [shape = 's32[1]{0}', space=sflag, size = 0x4, scoped, tag = 'scoped memory for tpu_custom_call.1']
    #allocation8 [shape = 'u8[2097152]{0}', space=vmem, size = 0x200000, scoped, tag = 'output window, operand 0']
    %9 = vsyncpa [#allocation5], 0
    %10 = vsyncpa [#allocation7], 0
    %11 = vsyncpa [#allocation4], 0
    %s12 = scalar_lea.sflag [#allocation4], 1
    %13 = vsyncpa %s12, 0
    loop: start=0, step=1, limit=4
    $region2: #{tpu_custom_call.1} parent=1 // loop_pre_header
      _
    $region3: #{tpu_custom_call.1} parent=1 // loop_header
      %s15 = sphi 0, %s19
      %p16 = scmp.ge.s32.totalorder %s15, 4
      %s22 = sphi 0, %s41
      %s23 = sphi 0, %s37
      %s24 = sphi 0, %s33
      %s25 = sphi 0, %s22
      %s26 = sphi 0, %s23
      %s27 = sphi 0, %s24
      %s28 = sphi 0, %s25
      %s29 = sphi 0, %s26
      %s30 = sphi 0, %s27
      %s42 = sphi 0, %s42
      %s44 = sphi 0, %s42
      %s45 = sphi 0, %s44
      %s59 = sphi 0, %s45
      %s63 = sphi 0, %s63
      %s65 = sphi 0, %s63
      %s66 = sphi 0, %s65
      %s80 = sphi 0, %s66
      %s88 = sphi 0, %s90
      %s91 = sphi 0, %s88
      %s92 = sphi 0, %s91
      %s108 = sphi 0, %s92
      %s116 = sphi 0, %s118
      %s119 = sphi 0, %s116
      %s120 = sphi 0, %s119
      %s136 = sphi 0, %s120
      %s146 = sphi 0, %s148
      %s149 = sphi 0, %s146
      %s150 = sphi 0, %s149
      %s166 = sphi 0, %s150
    $region4: #{tpu_custom_call.1} parent=1 // loop_header_branch
      %18 = sbr.rel (%p16) target = $region8
    $region5: #{tpu_custom_call.1} parent=1 // loop_body
      %s20 = ssub.s32 %s15, 1
      %s21 = ssub.s32 %s15, 2
      %s31 = sadd.s32 1, %s24
      %p32 = scmp.ge.s32.totalorder %s31, 1
      %s33 = scalar_select %p32, 0, %s31
      %s34 = sadd.s32 1, %s23
      %s35 = scalar_select %p32, %s34, %s23
      %p36 = scmp.ge.s32.totalorder %s35, 1
      %s37 = scalar_select %p36, 0, %s35
      %s38 = sadd.s32 1, %s22
      %s39 = scalar_select %p36, %s38, %s22
      %p40 = scmp.ge.s32.totalorder %s39, 2
      %s41 = scalar_select %p40, 0, %s39
      %s43 = sadd.s32 %s42, 1
      %p46 = scmp.eq.s32.totalorder %s15, 1
      %p47 = scmp.ne.s32.totalorder %s42, %s44
      %p48 = scmp.eq.s32.totalorder %s15, 0
      %p49 = por %p47, %p48
      %p50 = scmp.ne.s32.totalorder %s42, %s44
      %p51 = scmp.eq.s32.totalorder %s20, 1
      %p52 = por %p50, %p51
      %p53 = scmp.ne.s32.totalorder %s44, %s45
      %p54 = scmp.eq.s32.totalorder %s20, 0
      %p55 = por %p53, %p54
      %p56 = scmp.ne.s32.totalorder %s44, %s45
      %p57 = scmp.eq.s32.totalorder %s21, 1
      %p58 = por %p56, %p57
      %p60 = scmp.ne.s32.totalorder %s45, %s59
      %p61 = scmp.eq.s32.totalorder %s21, 0
      %p62 = por %p60, %p61
      %s64 = sadd.s32 %s63, 1
      %p67 = scmp.eq.s32.totalorder %s15, 1
      %p68 = scmp.ne.s32.totalorder %s63, %s65
      %p69 = scmp.eq.s32.totalorder %s15, 0
      %p70 = por %p68, %p69
      %p71 = scmp.ne.s32.totalorder %s63, %s65
      %p72 = scmp.eq.s32.totalorder %s20, 1
      %p73 = por %p71, %p72
      %p74 = scmp.ne.s32.totalorder %s65, %s66
      %p75 = scmp.eq.s32.totalorder %s20, 0
      %p76 = por %p74, %p75
      %p77 = scmp.ne.s32.totalorder %s65, %s66
      %p78 = scmp.eq.s32.totalorder %s21, 1
      %p79 = por %p77, %p78
      %p81 = scmp.ne.s32.totalorder %s66, %s80
      %p82 = scmp.eq.s32.totalorder %s21, 0
      %p83 = por %p81, %p82
      %s84 = ssub.s32 %s22, %s41
      %s85 = ssub.s32 %s24, %s33
      %s86 = sor.u32 %s84, %s85
      %p87 = scmp.eq.s32.totalorder %s86, 0
      %s89 = sadd.s32 %s88, 1
      %s90 = scalar_select %p87, %s88, %s89
      %p93 = pneg %p87
      %p94 = scmp.eq.s32.totalorder %s15, 1
      %p95 = por %p93, %p94
      %p96 = scmp.ne.s32.totalorder %s88, %s91
      %p97 = scmp.eq.s32.totalorder %s15, 0
      %p98 = por %p96, %p97
      %p99 = scmp.ne.s32.totalorder %s88, %s91
      %p100 = scmp.eq.s32.totalorder %s20, 1
      %p101 = por %p99, %p100
      %p102 = scmp.ne.s32.totalorder %s91, %s92
      %p103 = scmp.eq.s32.totalorder %s20, 0
      %p104 = por %p102, %p103
      %p105 = scmp.ne.s32.totalorder %s91, %s92
      %p106 = scmp.eq.s32.totalorder %s21, 1
      %p107 = por %p105, %p106
      %p109 = scmp.ne.s32.totalorder %s92, %s108
      %p110 = scmp.eq.s32.totalorder %s21, 0
      %p111 = por %p109, %p110
      %s112 = ssub.s32 %s22, %s41
      %s113 = ssub.s32 %s23, %s37
      %s114 = sor.u32 %s112, %s113
      %p115 = scmp.eq.s32.totalorder %s114, 0
      %s117 = sadd.s32 %s116, 1
      %s118 = scalar_select %p115, %s116, %s117
      %p121 = pneg %p115
      %p122 = scmp.eq.s32.totalorder %s15, 1
      %p123 = por %p121, %p122
      %p124 = scmp.ne.s32.totalorder %s116, %s119
      %p125 = scmp.eq.s32.totalorder %s15, 0
      %p126 = por %p124, %p125
      %p127 = scmp.ne.s32.totalorder %s116, %s119
      %p128 = scmp.eq.s32.totalorder %s20, 1
      %p129 = por %p127, %p128
      %p130 = scmp.ne.s32.totalorder %s119, %s120
      %p131 = scmp.eq.s32.totalorder %s20, 0
      %p132 = por %p130, %p131
      %p133 = scmp.ne.s32.totalorder %s119, %s120
      %p134 = scmp.eq.s32.totalorder %s21, 1
      %p135 = por %p133, %p134
      %p137 = scmp.ne.s32.totalorder %s120, %s136
      %p138 = scmp.eq.s32.totalorder %s21, 0
      %p139 = por %p137, %p138
      %s140 = ssub.s32 %s22, %s41
      %s141 = ssub.s32 %s23, %s37
      %s142 = sor.u32 %s140, %s141
      %s143 = ssub.s32 %s24, %s33
      %s144 = sor.u32 %s142, %s143
      %p145 = scmp.eq.s32.totalorder %s144, 0
      %s147 = sadd.s32 %s146, 1
      %s148 = scalar_select %p145, %s146, %s147
      %p151 = pneg %p145
      %p152 = scmp.eq.s32.totalorder %s15, 1
      %p153 = por %p151, %p152
      %p154 = scmp.ne.s32.totalorder %s146, %s149
      %p155 = scmp.eq.s32.totalorder %s15, 0
      %p156 = por %p154, %p155
      %p157 = scmp.ne.s32.totalorder %s146, %s149
      %p158 = scmp.eq.s32.totalorder %s20, 1
      %p159 = por %p157, %p158
      %p160 = scmp.ne.s32.totalorder %s149, %s150
      %p161 = scmp.eq.s32.totalorder %s20, 0
      %p162 = por %p160, %p161
      %p163 = scmp.ne.s32.totalorder %s149, %s150
      %p164 = scmp.eq.s32.totalorder %s21, 1
      %p165 = por %p163, %p164
      %p167 = scmp.ne.s32.totalorder %s150, %s166
      %p168 = scmp.eq.s32.totalorder %s21, 0
      %p169 = por %p167, %p168
      %p170 = scmp.le.s32.totalorder 1, %s15
      %p171 = scmp.lt.s32.totalorder %s15, 3
      %p172 = pnand %p170, %p171
      %p173 = pneg %p172
      // Predicated region
      $region9: #{tpu_custom_call.1} parent=5 // pred_check
        _
      $region10: #{tpu_custom_call.1} parent=5 // pred_check_branch
        %175 = sbr.rel (%p172) target = $region12
      $region11: #{tpu_custom_call.1} parent=5 // pred_region
        %s176 = ssub.s32 %s15, 1
        // Predicated region
        $region13: #{tpu_custom_call.1} parent=11 // pred_check
          %p177 = pneg %p55
        $region14: #{tpu_custom_call.1} parent=11 // pred_check_branch
          %179 = sbr.rel (%p177) target = $region16
        $region15: #{tpu_custom_call.1} parent=11 // pred_region
          %s181 = ssub.s32 16, 16
          %182 = vsyncadd [#allocation5], %s181
          %185 = dma.hbm_to_smem %s0, 16, [#allocation3], [#allocation5]
        $region16: #{tpu_custom_call.1} parent=11 // pred_fallthru
          _
        // Predicated region
        $region17: #{tpu_custom_call.1} parent=11 // pred_check
          %p186 = pneg %p76
        $region18: #{tpu_custom_call.1} parent=11 // pred_check_branch
          %188 = sbr.rel (%p186) target = $region20
        $region19: #{tpu_custom_call.1} parent=11 // pred_region
          %s190 = ssub.s32 16, 16
          %191 = vsyncadd [#allocation7], %s190
          %194 = dma.hbm_to_smem %s1, 16, [#allocation6], [#allocation7]
        $region20: #{tpu_custom_call.1} parent=11 // pred_fallthru
          _
      $region12: #{tpu_custom_call.1} parent=5 // pred_fallthru
        _
      %p195 = scmp.lt.s32.totalorder %s15, 2
      // Predicated region
      $region21: #{tpu_custom_call.1} parent=5 // pred_check
        %p196 = pneg %p195
      $region22: #{tpu_custom_call.1} parent=5 // pred_check_branch
        %198 = sbr.rel (%p196) target = $region24
      $region23: #{tpu_custom_call.1} parent=5 // pred_region
        // Predicated region
        $region25: #{tpu_custom_call.1} parent=23 // pred_check
          %p199 = pneg %p98
        $region26: #{tpu_custom_call.1} parent=23 // pred_check_branch
          %201 = sbr.rel (%p199) target = $region28
        $region27: #{tpu_custom_call.1} parent=23 // pred_region
          %s202 = smul.u32 2, %s24
          %p203 = scmp.lt.s32.totalorder %s22, 1
          %s204 = scalar_select %p203, %s22, 1
          %p205 = scmp.lt.s32.totalorder %s202, 1
          %s206 = scalar_select %p205, %s202, 1
          %s207 = smul.addr %s204, 2
          %s208 = sadd.s32 %s206, %s207
          %s209 = smul.addr %s208, 4
          %s210 = scalar_lea.vmem %s2, %s209
          %s211 = smul.u32 2, %s24
        $region28: #{tpu_custom_call.1} parent=23 // pred_fallthru
          _
        // Predicated region
        $region29: #{tpu_custom_call.1} parent=23 // pred_check
          %p212 = pneg %p126
        $region30: #{tpu_custom_call.1} parent=23 // pred_check_branch
          %214 = sbr.rel (%p212) target = $region32
        $region31: #{tpu_custom_call.1} parent=23 // pred_region
          %s215 = smul.u32 32, %s23
          %p216 = scmp.lt.s32.totalorder %s22, 1
          %s217 = scalar_select %p216, %s22, 1
          %p218 = scmp.lt.s32.totalorder %s215, 31
          %s219 = scalar_select %p218, %s215, 31
          %s220 = smul.addr %s217, 32
          %s221 = sadd.s32 %s219, %s220
          %s222 = smul.addr %s221, 8
          %s223 = scalar_lea.vmem %s3, %s222
          %s224 = smul.u32 32, %s23
        $region32: #{tpu_custom_call.1} parent=23 // pred_fallthru
          _
      $region24: #{tpu_custom_call.1} parent=5 // pred_fallthru
        _
      %p225 = scmp.le.s32.totalorder 1, %s15
      %p226 = scmp.lt.s32.totalorder %s15, 3
      %p227 = pnand %p225, %p226
      %p228 = pneg %p227
      // Predicated region
      $region33: #{tpu_custom_call.1} parent=5 // pred_check
        _
      $region34: #{tpu_custom_call.1} parent=5 // pred_check_branch
        %230 = sbr.rel (%p227) target = $region36
      $region35: #{tpu_custom_call.1} parent=5 // pred_region
        %s231 = ssub.s32 %s15, 1
        // Predicated region
        $region37: #{tpu_custom_call.1} parent=35 // pred_check
          %p232 = pneg %p55
        $region38: #{tpu_custom_call.1} parent=35 // pred_check_branch
          %234 = sbr.rel (%p232) target = $region40
        $region39: #{tpu_custom_call.1} parent=35 // pred_region
          %235 = dma.done [#allocation5], 16
        $region40: #{tpu_custom_call.1} parent=35 // pred_fallthru
          _
        // Predicated region
        $region41: #{tpu_custom_call.1} parent=35 // pred_check
          %p236 = pneg %p76
        $region42: #{tpu_custom_call.1} parent=35 // pred_check_branch
          %238 = sbr.rel (%p236) target = $region44
        $region43: #{tpu_custom_call.1} parent=35 // pred_region
          %239 = dma.done [#allocation7], 16
        $region44: #{tpu_custom_call.1} parent=35 // pred_fallthru
          _
        %240 = sfence
        %p241 = pneg %p55
        %p242 = pneg %p52
        %p243 = pneg %p76
        %p244 = pneg %p73
        %s245 = smul.u32 2, %s27
        %p246 = scmp.lt.s32.totalorder %s25, 1
        %s247 = scalar_select %p246, %s25, 1
        %p248 = scmp.lt.s32.totalorder %s245, 1
        %s249 = scalar_select %p248, %s245, 1
        %s250 = smul.addr %s247, 2
        %s251 = sadd.s32 %s249, %s250
        %s252 = smul.addr %s251, 4
        %s253 = scalar_lea.vmem %s2, %s252
        %p254 = pneg %p104
        %p255 = pneg %p101
        %s256 = smul.u32 32, %s26
        %p257 = scmp.lt.s32.totalorder %s25, 1
        %s258 = scalar_select %p257, %s25, 1
        %p259 = scmp.lt.s32.totalorder %s256, 31
        %s260 = scalar_select %p259, %s256, 31
        %s261 = smul.addr %s258, 32
        %s262 = sadd.s32 %s260, %s261
        %s263 = smul.addr %s262, 8
        %s264 = scalar_lea.vmem %s3, %s263
        %p265 = pneg %p132
        %p266 = pneg %p129
        %p267 = pneg %p162
        %p268 = pneg %p159
        %s269 = sand.u32 %s149, 1
        %s270 = scalar_lea.sflag [#allocation4], %s269
        %s271 = sand.u32 %s149, 1
        %s272 = smul.addr %s271, 2048
        %s273 = scalar_lea.vmem [#allocation8], %s272
        %s274 = smul.u32 2, %s27
        %p275 = scmp.lt.s32.totalorder %s25, 1
        %s276 = scalar_select %p275, %s25, 1
        %p277 = scmp.lt.s32.totalorder %s274, 1
        %s278 = scalar_select %p277, %s274, 1
        %s279 = smul.addr %s276, 2
        %s280 = sadd.s32 %s278, %s279
        %s281 = smul.addr %s280, 4
        %s282 = scalar_lea.vmem %s2, %s281
        %s283 = smul.u32 2, %s27
        %s284 = smul.u32 32, %s26
        %p285 = scmp.lt.s32.totalorder %s25, 1
        %s286 = scalar_select %p285, %s25, 1
        %p287 = scmp.lt.s32.totalorder %s284, 31
        %s288 = scalar_select %p287, %s284, 31
        %s289 = smul.addr %s286, 32
        %s290 = sadd.s32 %s288, %s289
        %s291 = smul.addr %s290, 8
        %s292 = scalar_lea.vmem %s3, %s291
        %s293 = smul.u32 32, %s26
        %s294 = smul.u32 32, %s26
        %s295 = smul.u32 2, %s27
        %s296 = sld [smem:[#allocation3]]
        %s297 = sld [smem:[#allocation3 + $0x1]]
        %v298 = vld [vmem:[%s282] sm:$0x77]
        %v299 = vld [vmem:[%s292] sm:$0xff]
        %v300 = vld [vmem:[%s292 + $0x8] sm:$0xff]
        %v301 = vld [vmem:[%s292 + $0x10] sm:$0xff]
        %v302 = vld [vmem:[%s292 + $0x18] sm:$0xff]
        %v303 = vld [vmem:[%s292 + $0x20] sm:$0xff]
        %v304 = vld [vmem:[%s292 + $0x28] sm:$0xff]
        %v305 = vld [vmem:[%s292 + $0x30] sm:$0xff]
        %v306 = vld [vmem:[%s292 + $0x38] sm:$0xff]
        %v307 = vld [vmem:[%s292 + $0x40] sm:$0xff]
        %v308 = vld [vmem:[%s292 + $0x48] sm:$0xff]
        %v309 = vld [vmem:[%s292 + $0x50] sm:$0xff]
        %v310 = vld [vmem:[%s292 + $0x58] sm:$0xff]
        %v311 = vld [vmem:[%s292 + $0x60] sm:$0xff]
        %v312 = vld [vmem:[%s292 + $0x68] sm:$0xff]
        %v313 = vld [vmem:[%s292 + $0x70] sm:$0xff]
        %v314 = vld [vmem:[%s292 + $0x78] sm:$0xff]
        %v315 = vld [vmem:[%s292 + $0x80] sm:$0xff]
        %v316 = vld [vmem:[%s292 + $0x88] sm:$0xff]
        %v317 = vld [vmem:[%s292 + $0x90] sm:$0xff]
        %v318 = vld [vmem:[%s292 + $0x98] sm:$0xff]
        %v319 = vld [vmem:[%s292 + $0xa0] sm:$0xff]
        %v320 = vld [vmem:[%s292 + $0xa8] sm:$0xff]
        %v321 = vld [vmem:[%s292 + $0xb0] sm:$0xff]
        %v322 = vld [vmem:[%s292 + $0xb8] sm:$0xff]
        %v323 = vld [vmem:[%s292 + $0xc0] sm:$0xff]
        %v324 = vld [vmem:[%s292 + $0xc8] sm:$0xff]
        %v325 = vld [vmem:[%s292 + $0xd0] sm:$0xff]
        %v326 = vld [vmem:[%s292 + $0xd8] sm:$0xff]
        %v327 = vld [vmem:[%s292 + $0xe0] sm:$0xff]
        %v328 = vld [vmem:[%s292 + $0xe8] sm:$0xff]
        %v329 = vld [vmem:[%s292 + $0xf0] sm:$0xff]
        %v330 = vld [vmem:[%s292 + $0xf8] sm:$0xff]
        %332 = vset.pattern.permute.xlu0 0
        %333 = vperm.xlu0 %332, %v299
        %v334 = vpop.permute.xlu0 %333
        %337 = vset.pattern.permute.xlu0 0
        %338 = vperm.xlu0 %337, %v300
        %v339 = vpop.permute.xlu0 %338
        %342 = vset.pattern.permute.xlu0 0
        %343 = vperm.xlu0 %342, %v301
        %v344 = vpop.permute.xlu0 %343
        %347 = vset.pattern.permute.xlu0 0
        %348 = vperm.xlu0 %347, %v302
        %v349 = vpop.permute.xlu0 %348
        %352 = vset.pattern.permute.xlu0 0
        %353 = vperm.xlu0 %352, %v303
        %v354 = vpop.permute.xlu0 %353
        %357 = vset.pattern.permute.xlu0 0
        %358 = vperm.xlu0 %357, %v304
        %v359 = vpop.permute.xlu0 %358
        %362 = vset.pattern.permute.xlu0 0
        %363 = vperm.xlu0 %362, %v305
        %v364 = vpop.permute.xlu0 %363
        %367 = vset.pattern.permute.xlu0 0
        %368 = vperm.xlu0 %367, %v306
        %v369 = vpop.permute.xlu0 %368
        %372 = vset.pattern.permute.xlu0 0
        %373 = vperm.xlu0 %372, %v307
        %v374 = vpop.permute.xlu0 %373
        %377 = vset.pattern.permute.xlu0 0
        %378 = vperm.xlu0 %377, %v308
        %v379 = vpop.permute.xlu0 %378
        %382 = vset.pattern.permute.xlu0 0
        %383 = vperm.xlu0 %382, %v309
        %v384 = vpop.permute.xlu0 %383
        %387 = vset.pattern.permute.xlu0 0
        %388 = vperm.xlu0 %387, %v310
        %v389 = vpop.permute.xlu0 %388
        %392 = vset.pattern.permute.xlu0 0
        %393 = vperm.xlu0 %392, %v311
        %v394 = vpop.permute.xlu0 %393
        %397 = vset.pattern.permute.xlu0 0
        %398 = vperm.xlu0 %397, %v312
        %v399 = vpop.permute.xlu0 %398
        %402 = vset.pattern.permute.xlu0 0
        %403 = vperm.xlu0 %402, %v313
        %v404 = vpop.permute.xlu0 %403
        %407 = vset.pattern.permute.xlu0 0
        %408 = vperm.xlu0 %407, %v314
        %v409 = vpop.permute.xlu0 %408
        %412 = vset.pattern.permute.xlu0 0
        %413 = vperm.xlu0 %412, %v315
        %v414 = vpop.permute.xlu0 %413
        %417 = vset.pattern.permute.xlu0 0
        %418 = vperm.xlu0 %417, %v316
        %v419 = vpop.permute.xlu0 %418
        %422 = vset.pattern.permute.xlu0 0
        %423 = vperm.xlu0 %422, %v317
        %v424 = vpop.permute.xlu0 %423
        %427 = vset.pattern.permute.xlu0 0
        %428 = vperm.xlu0 %427, %v318
        %v429 = vpop.permute.xlu0 %428
        %432 = vset.pattern.permute.xlu0 0
        %433 = vperm.xlu0 %432, %v319
        %v434 = vpop.permute.xlu0 %433
        %437 = vset.pattern.permute.xlu0 0
        %438 = vperm.xlu0 %437, %v320
        %v439 = vpop.permute.xlu0 %438
        %442 = vset.pattern.permute.xlu0 0
        %443 = vperm.xlu0 %442, %v321
        %v444 = vpop.permute.xlu0 %443
        %447 = vset.pattern.permute.xlu0 0
        %448 = vperm.xlu0 %447, %v322
        %v449 = vpop.permute.xlu0 %448
        %452 = vset.pattern.permute.xlu0 0
        %453 = vperm.xlu0 %452, %v323
        %v454 = vpop.permute.xlu0 %453
        %457 = vset.pattern.permute.xlu0 0
        %458 = vperm.xlu0 %457, %v324
        %v459 = vpop.permute.xlu0 %458
        %462 = vset.pattern.permute.xlu0 0
        %463 = vperm.xlu0 %462, %v325
        %v464 = vpop.permute.xlu0 %463
        %467 = vset.pattern.permute.xlu0 0
        %468 = vperm.xlu0 %467, %v326
        %v469 = vpop.permute.xlu0 %468
        %472 = vset.pattern.permute.xlu0 0
        %473 = vperm.xlu0 %472, %v327
        %v474 = vpop.permute.xlu0 %473
        %477 = vset.pattern.permute.xlu0 0
        %478 = vperm.xlu0 %477, %v328
        %v479 = vpop.permute.xlu0 %478
        %482 = vset.pattern.permute.xlu0 0
        %483 = vperm.xlu0 %482, %v329
        %v484 = vpop.permute.xlu0 %483
        %487 = vset.pattern.permute.xlu0 0
        %488 = vperm.xlu0 %487, %v330
        %v489 = vpop.permute.xlu0 %488
        %v492 = vlaneseq
        %v493 = vshrl.u32 %v492, 7
        %v494 = vsub.s32 0, %v493
        %v495 = vrot.slane %v298, %v494
        %v496 = vlaneseq
        %v497 = vshrl.u32 %v496, 7
        %v498 = vsub.s32 4, %v497
        %v499 = vrot.slane %v298, %v498
        %v502 = vlaneseq
        %v503 = vshrl.u32 %v502, 7
        %v504 = vsub.s32 0, %v503
        %v505 = vrot.slane %v495, %v504
        %v506 = vlaneseq
        %v507 = vshrl.u32 %v506, 7
        %v508 = vsub.s32 0, %v507
        %v509 = vrot.slane %v499, %v508
        %v510 = vsub.f32 %v334, %v505
        %v511 = vsub.f32 %v334, %v509
        %v512 = vsub.f32 %v339, %v505
        %v513 = vsub.f32 %v339, %v509
        %v514 = vsub.f32 %v344, %v505
        %v515 = vsub.f32 %v344, %v509
        %v516 = vsub.f32 %v349, %v505
        %v517 = vsub.f32 %v349, %v509
        %v518 = vsub.f32 %v354, %v505
        %v519 = vsub.f32 %v354, %v509
        %v520 = vsub.f32 %v359, %v505
        %v521 = vsub.f32 %v359, %v509
        %v522 = vsub.f32 %v364, %v505
        %v523 = vsub.f32 %v364, %v509
        %v524 = vsub.f32 %v369, %v505
        %v525 = vsub.f32 %v369, %v509
        %v526 = vsub.f32 %v374, %v505
        %v527 = vsub.f32 %v374, %v509
        %v528 = vsub.f32 %v379, %v505
        %v529 = vsub.f32 %v379, %v509
        %v530 = vsub.f32 %v384, %v505
        %v531 = vsub.f32 %v384, %v509
        %v532 = vsub.f32 %v389, %v505
        %v533 = vsub.f32 %v389, %v509
        %v534 = vsub.f32 %v394, %v505
        %v535 = vsub.f32 %v394, %v509
        %v536 = vsub.f32 %v399, %v505
        %v537 = vsub.f32 %v399, %v509
        %v538 = vsub.f32 %v404, %v505
        %v539 = vsub.f32 %v404, %v509
        %v540 = vsub.f32 %v409, %v505
        %v541 = vsub.f32 %v409, %v509
        %v542 = vsub.f32 %v414, %v505
        %v543 = vsub.f32 %v414, %v509
        %v544 = vsub.f32 %v419, %v505
        %v545 = vsub.f32 %v419, %v509
        %v546 = vsub.f32 %v424, %v505
        %v547 = vsub.f32 %v424, %v509
        %v548 = vsub.f32 %v429, %v505
        %v549 = vsub.f32 %v429, %v509
        %v550 = vsub.f32 %v434, %v505
        %v551 = vsub.f32 %v434, %v509
        %v552 = vsub.f32 %v439, %v505
        %v553 = vsub.f32 %v439, %v509
        %v554 = vsub.f32 %v444, %v505
        %v555 = vsub.f32 %v444, %v509
        %v556 = vsub.f32 %v449, %v505
        %v557 = vsub.f32 %v449, %v509
        %v558 = vsub.f32 %v454, %v505
        %v559 = vsub.f32 %v454, %v509
        %v560 = vsub.f32 %v459, %v505
        %v561 = vsub.f32 %v459, %v509
        %v562 = vsub.f32 %v464, %v505
        %v563 = vsub.f32 %v464, %v509
        %v564 = vsub.f32 %v469, %v505
        %v565 = vsub.f32 %v469, %v509
        %v566 = vsub.f32 %v474, %v505
        %v567 = vsub.f32 %v474, %v509
        %v568 = vsub.f32 %v479, %v505
        %v569 = vsub.f32 %v479, %v509
        %v570 = vsub.f32 %v484, %v505
        %v571 = vsub.f32 %v484, %v509
        %v572 = vsub.f32 %v489, %v505
        %v573 = vsub.f32 %v489, %v509
        %v574 = vand.u32 2147483647, %v510
        %v575 = vand.u32 2147483647, %v511
        %v576 = vand.u32 2147483647, %v512
        %v577 = vand.u32 2147483647, %v513
        %v578 = vand.u32 2147483647, %v514
        %v579 = vand.u32 2147483647, %v515
        %v580 = vand.u32 2147483647, %v516
        %v581 = vand.u32 2147483647, %v517
        %v582 = vand.u32 2147483647, %v518
        %v583 = vand.u32 2147483647, %v519
        %v584 = vand.u32 2147483647, %v520
        %v585 = vand.u32 2147483647, %v521
        %v586 = vand.u32 2147483647, %v522
        %v587 = vand.u32 2147483647, %v523
        %v588 = vand.u32 2147483647, %v524
        %v589 = vand.u32 2147483647, %v525
        %v590 = vand.u32 2147483647, %v526
        %v591 = vand.u32 2147483647, %v527
        %v592 = vand.u32 2147483647, %v528
        %v593 = vand.u32 2147483647, %v529
        %v594 = vand.u32 2147483647, %v530
        %v595 = vand.u32 2147483647, %v531
        %v596 = vand.u32 2147483647, %v532
        %v597 = vand.u32 2147483647, %v533
        %v598 = vand.u32 2147483647, %v534
        %v599 = vand.u32 2147483647, %v535
        %v600 = vand.u32 2147483647, %v536
        %v601 = vand.u32 2147483647, %v537
        %v602 = vand.u32 2147483647, %v538
        %v603 = vand.u32 2147483647, %v539
        %v604 = vand.u32 2147483647, %v540
        %v605 = vand.u32 2147483647, %v541
        %v606 = vand.u32 2147483647, %v542
        %v607 = vand.u32 2147483647, %v543
        %v608 = vand.u32 2147483647, %v544
        %v609 = vand.u32 2147483647, %v545
        %v610 = vand.u32 2147483647, %v546
        %v611 = vand.u32 2147483647, %v547
        %v612 = vand.u32 2147483647, %v548
        %v613 = vand.u32 2147483647, %v549
        %v614 = vand.u32 2147483647, %v550
        %v615 = vand.u32 2147483647, %v551
        %v616 = vand.u32 2147483647, %v552
        %v617 = vand.u32 2147483647, %v553
        %v618 = vand.u32 2147483647, %v554
        %v619 = vand.u32 2147483647, %v555
        %v620 = vand.u32 2147483647, %v556
        %v621 = vand.u32 2147483647, %v557
        %v622 = vand.u32 2147483647, %v558
        %v623 = vand.u32 2147483647, %v559
        %v624 = vand.u32 2147483647, %v560
        %v625 = vand.u32 2147483647, %v561
        %v626 = vand.u32 2147483647, %v562
        %v627 = vand.u32 2147483647, %v563
        %v628 = vand.u32 2147483647, %v564
        %v629 = vand.u32 2147483647, %v565
        %v630 = vand.u32 2147483647, %v566
        %v631 = vand.u32 2147483647, %v567
        %v632 = vand.u32 2147483647, %v568
        %v633 = vand.u32 2147483647, %v569
        %v634 = vand.u32 2147483647, %v570
        %v635 = vand.u32 2147483647, %v571
        %v636 = vand.u32 2147483647, %v572
        %v637 = vand.u32 2147483647, %v573
        %638 = vset.pattern.permute.xlu0 1
        %639 = vperm.xlu0 %638, %v299
        %v640 = vpop.permute.xlu0 %639
        %642 = vset.pattern.permute.xlu0 1
        %643 = vperm.xlu0 %642, %v300
        %v644 = vpop.permute.xlu0 %643
        %646 = vset.pattern.permute.xlu0 1
        %647 = vperm.xlu0 %646, %v301
        %v648 = vpop.permute.xlu0 %647
        %650 = vset.pattern.permute.xlu0 1
        %651 = vperm.xlu0 %650, %v302
        %v652 = vpop.permute.xlu0 %651
        %654 = vset.pattern.permute.xlu0 1
        %655 = vperm.xlu0 %654, %v303
        %v656 = vpop.permute.xlu0 %655
        %658 = vset.pattern.permute.xlu0 1
        %659 = vperm.xlu0 %658, %v304
        %v660 = vpop.permute.xlu0 %659
        %662 = vset.pattern.permute.xlu0 1
        %663 = vperm.xlu0 %662, %v305
        %v664 = vpop.permute.xlu0 %663
        %666 = vset.pattern.permute.xlu0 1
        %667 = vperm.xlu0 %666, %v306
        %v668 = vpop.permute.xlu0 %667
        %670 = vset.pattern.permute.xlu0 1
        %671 = vperm.xlu0 %670, %v307
        %v672 = vpop.permute.xlu0 %671
        %674 = vset.pattern.permute.xlu0 1
        %675 = vperm.xlu0 %674, %v308
        %v676 = vpop.permute.xlu0 %675
        %678 = vset.pattern.permute.xlu0 1
        %679 = vperm.xlu0 %678, %v309
        %v680 = vpop.permute.xlu0 %679
        %682 = vset.pattern.permute.xlu0 1
        %683 = vperm.xlu0 %682, %v310
        %v684 = vpop.permute.xlu0 %683
        %686 = vset.pattern.permute.xlu0 1
        %687 = vperm.xlu0 %686, %v311
        %v688 = vpop.permute.xlu0 %687
        %690 = vset.pattern.permute.xlu0 1
        %691 = vperm.xlu0 %690, %v312
        %v692 = vpop.permute.xlu0 %691
        %694 = vset.pattern.permute.xlu0 1
        %695 = vperm.xlu0 %694, %v313
        %v696 = vpop.permute.xlu0 %695
        %698 = vset.pattern.permute.xlu0 1
        %699 = vperm.xlu0 %698, %v314
        %v700 = vpop.permute.xlu0 %699
        %702 = vset.pattern.permute.xlu0 1
        %703 = vperm.xlu0 %702, %v315
        %v704 = vpop.permute.xlu0 %703
        %706 = vset.pattern.permute.xlu0 1
        %707 = vperm.xlu0 %706, %v316
        %v708 = vpop.permute.xlu0 %707
        %710 = vset.pattern.permute.xlu0 1
        %711 = vperm.xlu0 %710, %v317
        %v712 = vpop.permute.xlu0 %711
        %714 = vset.pattern.permute.xlu0 1
        %715 = vperm.xlu0 %714, %v318
        %v716 = vpop.permute.xlu0 %715
        %718 = vset.pattern.permute.xlu0 1
        %719 = vperm.xlu0 %718, %v319
        %v720 = vpop.permute.xlu0 %719
        %722 = vset.pattern.permute.xlu0 1
        %723 = vperm.xlu0 %722, %v320
        %v724 = vpop.permute.xlu0 %723
        %726 = vset.pattern.permute.xlu0 1
        %727 = vperm.xlu0 %726, %v321
        %v728 = vpop.permute.xlu0 %727
        %730 = vset.pattern.permute.xlu0 1
        %731 = vperm.xlu0 %730, %v322
        %v732 = vpop.permute.xlu0 %731
        %734 = vset.pattern.permute.xlu0 1
        %735 = vperm.xlu0 %734, %v323
        %v736 = vpop.permute.xlu0 %735
        %738 = vset.pattern.permute.xlu0 1
        %739 = vperm.xlu0 %738, %v324
        %v740 = vpop.permute.xlu0 %739
        %742 = vset.pattern.permute.xlu0 1
        %743 = vperm.xlu0 %742, %v325
        %v744 = vpop.permute.xlu0 %743
        %746 = vset.pattern.permute.xlu0 1
        %747 = vperm.xlu0 %746, %v326
        %v748 = vpop.permute.xlu0 %747
        %750 = vset.pattern.permute.xlu0 1
        %751 = vperm.xlu0 %750, %v327
        %v752 = vpop.permute.xlu0 %751
        %754 = vset.pattern.permute.xlu0 1
        %755 = vperm.xlu0 %754, %v328
        %v756 = vpop.permute.xlu0 %755
        %758 = vset.pattern.permute.xlu0 1
        %759 = vperm.xlu0 %758, %v329
        %v760 = vpop.permute.xlu0 %759
        %762 = vset.pattern.permute.xlu0 1
        %763 = vperm.xlu0 %762, %v330
        %v764 = vpop.permute.xlu0 %763
        %v766 = vlaneseq
        %v767 = vshrl.u32 %v766, 7
        %v768 = vsub.s32 1, %v767
        %v769 = vrot.slane %v298, %v768
        %v770 = vlaneseq
        %v771 = vshrl.u32 %v770, 7
        %v772 = vsub.s32 5, %v771
        %v773 = vrot.slane %v298, %v772
        %v776 = vlaneseq
        %v777 = vshrl.u32 %v776, 7
        %v778 = vsub.s32 1, %v777
        %v779 = vrot.slane %v769, %v778
        %v780 = vlaneseq
        %v781 = vshrl.u32 %v780, 7
        %v782 = vsub.s32 1, %v781
        %v783 = vrot.slane %v773, %v782
        %v784 = vsub.f32 %v640, %v779
        %v785 = vsub.f32 %v640, %v783
        %v786 = vsub.f32 %v644, %v779
        %v787 = vsub.f32 %v644, %v783
        %v788 = vsub.f32 %v648, %v779
        %v789 = vsub.f32 %v648, %v783
        %v790 = vsub.f32 %v652, %v779
        %v791 = vsub.f32 %v652, %v783
        %v792 = vsub.f32 %v656, %v779
        %v793 = vsub.f32 %v656, %v783
        %v794 = vsub.f32 %v660, %v779
        %v795 = vsub.f32 %v660, %v783
        %v796 = vsub.f32 %v664, %v779
        %v797 = vsub.f32 %v664, %v783
        %v798 = vsub.f32 %v668, %v779
        %v799 = vsub.f32 %v668, %v783
        %v800 = vsub.f32 %v672, %v779
        %v801 = vsub.f32 %v672, %v783
        %v802 = vsub.f32 %v676, %v779
        %v803 = vsub.f32 %v676, %v783
        %v804 = vsub.f32 %v680, %v779
        %v805 = vsub.f32 %v680, %v783
        %v806 = vsub.f32 %v684, %v779
        %v807 = vsub.f32 %v684, %v783
        %v808 = vsub.f32 %v688, %v779
        %v809 = vsub.f32 %v688, %v783
        %v810 = vsub.f32 %v692, %v779
        %v811 = vsub.f32 %v692, %v783
        %v812 = vsub.f32 %v696, %v779
        %v813 = vsub.f32 %v696, %v783
        %v814 = vsub.f32 %v700, %v779
        %v815 = vsub.f32 %v700, %v783
        %v816 = vsub.f32 %v704, %v779
        %v817 = vsub.f32 %v704, %v783
        %v818 = vsub.f32 %v708, %v779
        %v819 = vsub.f32 %v708, %v783
        %v820 = vsub.f32 %v712, %v779
        %v821 = vsub.f32 %v712, %v783
        %v822 = vsub.f32 %v716, %v779
        %v823 = vsub.f32 %v716, %v783
        %v824 = vsub.f32 %v720, %v779
        %v825 = vsub.f32 %v720, %v783
        %v826 = vsub.f32 %v724, %v779
        %v827 = vsub.f32 %v724, %v783
        %v828 = vsub.f32 %v728, %v779
        %v829 = vsub.f32 %v728, %v783
        %v830 = vsub.f32 %v732, %v779
        %v831 = vsub.f32 %v732, %v783
        %v832 = vsub.f32 %v736, %v779
        %v833 = vsub.f32 %v736, %v783
        %v834 = vsub.f32 %v740, %v779
        %v835 = vsub.f32 %v740, %v783
        %v836 = vsub.f32 %v744, %v779
        %v837 = vsub.f32 %v744, %v783
        %v838 = vsub.f32 %v748, %v779
        %v839 = vsub.f32 %v748, %v783
        %v840 = vsub.f32 %v752, %v779
        %v841 = vsub.f32 %v752, %v783
        %v842 = vsub.f32 %v756, %v779
        %v843 = vsub.f32 %v756, %v783
        %v844 = vsub.f32 %v760, %v779
        %v845 = vsub.f32 %v760, %v783
        %v846 = vsub.f32 %v764, %v779
        %v847 = vsub.f32 %v764, %v783
        %v848 = vand.u32 2147483647, %v784
        %v849 = vand.u32 2147483647, %v785
        %v850 = vand.u32 2147483647, %v786
        %v851 = vand.u32 2147483647, %v787
        %v852 = vand.u32 2147483647, %v788
        %v853 = vand.u32 2147483647, %v789
        %v854 = vand.u32 2147483647, %v790
        %v855 = vand.u32 2147483647, %v791
        %v856 = vand.u32 2147483647, %v792
        %v857 = vand.u32 2147483647, %v793
        %v858 = vand.u32 2147483647, %v794
        %v859 = vand.u32 2147483647, %v795
        %v860 = vand.u32 2147483647, %v796
        %v861 = vand.u32 2147483647, %v797
        %v862 = vand.u32 2147483647, %v798
        %v863 = vand.u32 2147483647, %v799
        %v864 = vand.u32 2147483647, %v800
        %v865 = vand.u32 2147483647, %v801
        %v866 = vand.u32 2147483647, %v802
        %v867 = vand.u32 2147483647, %v803
        %v868 = vand.u32 2147483647, %v804
        %v869 = vand.u32 2147483647, %v805
        %v870 = vand.u32 2147483647, %v806
        %v871 = vand.u32 2147483647, %v807
        %v872 = vand.u32 2147483647, %v808
        %v873 = vand.u32 2147483647, %v809
        %v874 = vand.u32 2147483647, %v810
        %v875 = vand.u32 2147483647, %v811
        %v876 = vand.u32 2147483647, %v812
        %v877 = vand.u32 2147483647, %v813
        %v878 = vand.u32 2147483647, %v814
        %v879 = vand.u32 2147483647, %v815
        %v880 = vand.u32 2147483647, %v816
        %v881 = vand.u32 2147483647, %v817
        %v882 = vand.u32 2147483647, %v818
        %v883 = vand.u32 2147483647, %v819
        %v884 = vand.u32 2147483647, %v820
        %v885 = vand.u32 2147483647, %v821
        %v886 = vand.u32 2147483647, %v822
        %v887 = vand.u32 2147483647, %v823
        %v888 = vand.u32 2147483647, %v824
        %v889 = vand.u32 2147483647, %v825
        %v890 = vand.u32 2147483647, %v826
        %v891 = vand.u32 2147483647, %v827
        %v892 = vand.u32 2147483647, %v828
        %v893 = vand.u32 2147483647, %v829
        %v894 = vand.u32 2147483647, %v830
        %v895 = vand.u32 2147483647, %v831
        %v896 = vand.u32 2147483647, %v832
        %v897 = vand.u32 2147483647, %v833
        %v898 = vand.u32 2147483647, %v834
        %v899 = vand.u32 2147483647, %v835
        %v900 = vand.u32 2147483647, %v836
        %v901 = vand.u32 2147483647, %v837
        %v902 = vand.u32 2147483647, %v838
        %v903 = vand.u32 2147483647, %v839
        %v904 = vand.u32 2147483647, %v840
        %v905 = vand.u32 2147483647, %v841
        %v906 = vand.u32 2147483647, %v842
        %v907 = vand.u32 2147483647, %v843
        %v908 = vand.u32 2147483647, %v844
        %v909 = vand.u32 2147483647, %v845
        %v910 = vand.u32 2147483647, %v846
        %v911 = vand.u32 2147483647, %v847
        %v912 = vadd.f32 %v574, %v848
        %v913 = vadd.f32 %v575, %v849
        %v914 = vadd.f32 %v576, %v850
        %v915 = vadd.f32 %v577, %v851
        %v916 = vadd.f32 %v578, %v852
        %v917 = vadd.f32 %v579, %v853
        %v918 = vadd.f32 %v580, %v854
        %v919 = vadd.f32 %v581, %v855
        %v920 = vadd.f32 %v582, %v856
        %v921 = vadd.f32 %v583, %v857
        %v922 = vadd.f32 %v584, %v858
        %v923 = vadd.f32 %v585, %v859
        %v924 = vadd.f32 %v586, %v860
        %v925 = vadd.f32 %v587, %v861
        %v926 = vadd.f32 %v588, %v862
        %v927 = vadd.f32 %v589, %v863
        %v928 = vadd.f32 %v590, %v864
        %v929 = vadd.f32 %v591, %v865
        %v930 = vadd.f32 %v592, %v866
        %v931 = vadd.f32 %v593, %v867
        %v932 = vadd.f32 %v594, %v868
        %v933 = vadd.f32 %v595, %v869
        %v934 = vadd.f32 %v596, %v870
        %v935 = vadd.f32 %v597, %v871
        %v936 = vadd.f32 %v598, %v872
        %v937 = vadd.f32 %v599, %v873
        %v938 = vadd.f32 %v600, %v874
        %v939 = vadd.f32 %v601, %v875
        %v940 = vadd.f32 %v602, %v876
        %v941 = vadd.f32 %v603, %v877
        %v942 = vadd.f32 %v604, %v878
        %v943 = vadd.f32 %v605, %v879
        %v944 = vadd.f32 %v606, %v880
        %v945 = vadd.f32 %v607, %v881
        %v946 = vadd.f32 %v608, %v882
        %v947 = vadd.f32 %v609, %v883
        %v948 = vadd.f32 %v610, %v884
        %v949 = vadd.f32 %v611, %v885
        %v950 = vadd.f32 %v612, %v886
        %v951 = vadd.f32 %v613, %v887
        %v952 = vadd.f32 %v614, %v888
        %v953 = vadd.f32 %v615, %v889
        %v954 = vadd.f32 %v616, %v890
        %v955 = vadd.f32 %v617, %v891
        %v956 = vadd.f32 %v618, %v892
        %v957 = vadd.f32 %v619, %v893
        %v958 = vadd.f32 %v620, %v894
        %v959 = vadd.f32 %v621, %v895
        %v960 = vadd.f32 %v622, %v896
        %v961 = vadd.f32 %v623, %v897
        %v962 = vadd.f32 %v624, %v898
        %v963 = vadd.f32 %v625, %v899
        %v964 = vadd.f32 %v626, %v900
        %v965 = vadd.f32 %v627, %v901
        %v966 = vadd.f32 %v628, %v902
        %v967 = vadd.f32 %v629, %v903
        %v968 = vadd.f32 %v630, %v904
        %v969 = vadd.f32 %v631, %v905
        %v970 = vadd.f32 %v632, %v906
        %v971 = vadd.f32 %v633, %v907
        %v972 = vadd.f32 %v634, %v908
        %v973 = vadd.f32 %v635, %v909
        %v974 = vadd.f32 %v636, %v910
        %v975 = vadd.f32 %v637, %v911
        %v976 = vstv %s296
        %v977 = vmul.f32 %v976, %v912
        %v978 = vmul.f32 %v976, %v913
        %v979 = vmul.f32 %v976, %v914
        %v980 = vmul.f32 %v976, %v915
        %v981 = vmul.f32 %v976, %v916
        %v982 = vmul.f32 %v976, %v917
        %v983 = vmul.f32 %v976, %v918
        %v984 = vmul.f32 %v976, %v919
        %v985 = vmul.f32 %v976, %v920
        %v986 = vmul.f32 %v976, %v921
        %v987 = vmul.f32 %v976, %v922
        %v988 = vmul.f32 %v976, %v923
        %v989 = vmul.f32 %v976, %v924
        %v990 = vmul.f32 %v976, %v925
        %v991 = vmul.f32 %v976, %v926
        %v992 = vmul.f32 %v976, %v927
        %v993 = vmul.f32 %v976, %v928
        %v994 = vmul.f32 %v976, %v929
        %v995 = vmul.f32 %v976, %v930
        %v996 = vmul.f32 %v976, %v931
        %v997 = vmul.f32 %v976, %v932
        %v998 = vmul.f32 %v976, %v933
        %v999 = vmul.f32 %v976, %v934
        %v1000 = vmul.f32 %v976, %v935
        %v1001 = vmul.f32 %v976, %v936
        %v1002 = vmul.f32 %v976, %v937
        %v1003 = vmul.f32 %v976, %v938
        %v1004 = vmul.f32 %v976, %v939
        %v1005 = vmul.f32 %v976, %v940
        %v1006 = vmul.f32 %v976, %v941
        %v1007 = vmul.f32 %v976, %v942
        %v1008 = vmul.f32 %v976, %v943
        %v1009 = vmul.f32 %v976, %v944
        %v1010 = vmul.f32 %v976, %v945
        %v1011 = vmul.f32 %v976, %v946
        %v1012 = vmul.f32 %v976, %v947
        %v1013 = vmul.f32 %v976, %v948
        %v1014 = vmul.f32 %v976, %v949
        %v1015 = vmul.f32 %v976, %v950
        %v1016 = vmul.f32 %v976, %v951
        %v1017 = vmul.f32 %v976, %v952
        %v1018 = vmul.f32 %v976, %v953
        %v1019 = vmul.f32 %v976, %v954
        %v1020 = vmul.f32 %v976, %v955
        %v1021 = vmul.f32 %v976, %v956
        %v1022 = vmul.f32 %v976, %v957
        %v1023 = vmul.f32 %v976, %v958
        %v1024 = vmul.f32 %v976, %v959
        %v1025 = vmul.f32 %v976, %v960
        %v1026 = vmul.f32 %v976, %v961
        %v1027 = vmul.f32 %v976, %v962
        %v1028 = vmul.f32 %v976, %v963
        %v1029 = vmul.f32 %v976, %v964
        %v1030 = vmul.f32 %v976, %v965
        %v1031 = vmul.f32 %v976, %v966
        %v1032 = vmul.f32 %v976, %v967
        %v1033 = vmul.f32 %v976, %v968
        %v1034 = vmul.f32 %v976, %v969
        %v1035 = vmul.f32 %v976, %v970
        %v1036 = vmul.f32 %v976, %v971
        %v1037 = vmul.f32 %v976, %v972
        %v1038 = vmul.f32 %v976, %v973
        %v1039 = vmul.f32 %v976, %v974
        %v1040 = vmul.f32 %v976, %v975
        %1041 = vset.pattern.permute.xlu0 2
        %1042 = vperm.xlu0 %1041, %v299
        %v1043 = vpop.permute.xlu0 %1042
        %1045 = vset.pattern.permute.xlu0 2
        %1046 = vperm.xlu0 %1045, %v300
        %v1047 = vpop.permute.xlu0 %1046
        %1049 = vset.pattern.permute.xlu0 2
        %1050 = vperm.xlu0 %1049, %v301
        %v1051 = vpop.permute.xlu0 %1050
        %1053 = vset.pattern.permute.xlu0 2
        %1054 = vperm.xlu0 %1053, %v302
        %v1055 = vpop.permute.xlu0 %1054
        %1057 = vset.pattern.permute.xlu0 2
        %1058 = vperm.xlu0 %1057, %v303
        %v1059 = vpop.permute.xlu0 %1058
        %1061 = vset.pattern.permute.xlu0 2
        %1062 = vperm.xlu0 %1061, %v304
        %v1063 = vpop.permute.xlu0 %1062
        %1065 = vset.pattern.permute.xlu0 2
        %1066 = vperm.xlu0 %1065, %v305
        %v1067 = vpop.permute.xlu0 %1066
        %1069 = vset.pattern.permute.xlu0 2
        %1070 = vperm.xlu0 %1069, %v306
        %v1071 = vpop.permute.xlu0 %1070
        %1073 = vset.pattern.permute.xlu0 2
        %1074 = vperm.xlu0 %1073, %v307
        %v1075 = vpop.permute.xlu0 %1074
        %1077 = vset.pattern.permute.xlu0 2
        %1078 = vperm.xlu0 %1077, %v308
        %v1079 = vpop.permute.xlu0 %1078
        %1081 = vset.pattern.permute.xlu0 2
        %1082 = vperm.xlu0 %1081, %v309
        %v1083 = vpop.permute.xlu0 %1082
        %1085 = vset.pattern.permute.xlu0 2
        %1086 = vperm.xlu0 %1085, %v310
        %v1087 = vpop.permute.xlu0 %1086
        %1089 = vset.pattern.permute.xlu0 2
        %1090 = vperm.xlu0 %1089, %v311
        %v1091 = vpop.permute.xlu0 %1090
        %1093 = vset.pattern.permute.xlu0 2
        %1094 = vperm.xlu0 %1093, %v312
        %v1095 = vpop.permute.xlu0 %1094
        %1097 = vset.pattern.permute.xlu0 2
        %1098 = vperm.xlu0 %1097, %v313
        %v1099 = vpop.permute.xlu0 %1098
        %1101 = vset.pattern.permute.xlu0 2
        %1102 = vperm.xlu0 %1101, %v314
        %v1103 = vpop.permute.xlu0 %1102
        %1105 = vset.pattern.permute.xlu0 2
        %1106 = vperm.xlu0 %1105, %v315
        %v1107 = vpop.permute.xlu0 %1106
        %1109 = vset.pattern.permute.xlu0 2
        %1110 = vperm.xlu0 %1109, %v316
        %v1111 = vpop.permute.xlu0 %1110
        %1113 = vset.pattern.permute.xlu0 2
        %1114 = vperm.xlu0 %1113, %v317
        %v1115 = vpop.permute.xlu0 %1114
        %1117 = vset.pattern.permute.xlu0 2
        %1118 = vperm.xlu0 %1117, %v318
        %v1119 = vpop.permute.xlu0 %1118
        %1121 = vset.pattern.permute.xlu0 2
        %1122 = vperm.xlu0 %1121, %v319
        %v1123 = vpop.permute.xlu0 %1122
        %1125 = vset.pattern.permute.xlu0 2
        %1126 = vperm.xlu0 %1125, %v320
        %v1127 = vpop.permute.xlu0 %1126
        %1129 = vset.pattern.permute.xlu0 2
        %1130 = vperm.xlu0 %1129, %v321
        %v1131 = vpop.permute.xlu0 %1130
        %1133 = vset.pattern.permute.xlu0 2
        %1134 = vperm.xlu0 %1133, %v322
        %v1135 = vpop.permute.xlu0 %1134
        %1137 = vset.pattern.permute.xlu0 2
        %1138 = vperm.xlu0 %1137, %v323
        %v1139 = vpop.permute.xlu0 %1138
        %1141 = vset.pattern.permute.xlu0 2
        %1142 = vperm.xlu0 %1141, %v324
        %v1143 = vpop.permute.xlu0 %1142
        %1145 = vset.pattern.permute.xlu0 2
        %1146 = vperm.xlu0 %1145, %v325
        %v1147 = vpop.permute.xlu0 %1146
        %1149 = vset.pattern.permute.xlu0 2
        %1150 = vperm.xlu0 %1149, %v326
        %v1151 = vpop.permute.xlu0 %1150
        %1153 = vset.pattern.permute.xlu0 2
        %1154 = vperm.xlu0 %1153, %v327
        %v1155 = vpop.permute.xlu0 %1154
        %1157 = vset.pattern.permute.xlu0 2
        %1158 = vperm.xlu0 %1157, %v328
        %v1159 = vpop.permute.xlu0 %1158
        %1161 = vset.pattern.permute.xlu0 2
        %1162 = vperm.xlu0 %1161, %v329
        %v1163 = vpop.permute.xlu0 %1162
        %1165 = vset.pattern.permute.xlu0 2
        %1166 = vperm.xlu0 %1165, %v330
        %v1167 = vpop.permute.xlu0 %1166
        %v1169 = vlaneseq
        %v1170 = vshrl.u32 %v1169, 7
        %v1171 = vsub.s32 2, %v1170
        %v1172 = vrot.slane %v298, %v1171
        %v1173 = vlaneseq
        %v1174 = vshrl.u32 %v1173, 7
        %v1175 = vsub.s32 6, %v1174
        %v1176 = vrot.slane %v298, %v1175
        %v1179 = vlaneseq
        %v1180 = vshrl.u32 %v1179, 7
        %v1181 = vsub.s32 2, %v1180
        %v1182 = vrot.slane %v1172, %v1181
        %v1183 = vlaneseq
        %v1184 = vshrl.u32 %v1183, 7
        %v1185 = vsub.s32 2, %v1184
        %v1186 = vrot.slane %v1176, %v1185
        %v1187 = vsub.f32 %v1043, %v1182
        %v1188 = vsub.f32 %v1043, %v1186
        %v1189 = vsub.f32 %v1047, %v1182
        %v1190 = vsub.f32 %v1047, %v1186
        %v1191 = vsub.f32 %v1051, %v1182
        %v1192 = vsub.f32 %v1051, %v1186
        %v1193 = vsub.f32 %v1055, %v1182
        %v1194 = vsub.f32 %v1055, %v1186
        %v1195 = vsub.f32 %v1059, %v1182
        %v1196 = vsub.f32 %v1059, %v1186
        %v1197 = vsub.f32 %v1063, %v1182
        %v1198 = vsub.f32 %v1063, %v1186
        %v1199 = vsub.f32 %v1067, %v1182
        %v1200 = vsub.f32 %v1067, %v1186
        %v1201 = vsub.f32 %v1071, %v1182
        %v1202 = vsub.f32 %v1071, %v1186
        %v1203 = vsub.f32 %v1075, %v1182
        %v1204 = vsub.f32 %v1075, %v1186
        %v1205 = vsub.f32 %v1079, %v1182
        %v1206 = vsub.f32 %v1079, %v1186
        %v1207 = vsub.f32 %v1083, %v1182
        %v1208 = vsub.f32 %v1083, %v1186
        %v1209 = vsub.f32 %v1087, %v1182
        %v1210 = vsub.f32 %v1087, %v1186
        %v1211 = vsub.f32 %v1091, %v1182
        %v1212 = vsub.f32 %v1091, %v1186
        %v1213 = vsub.f32 %v1095, %v1182
        %v1214 = vsub.f32 %v1095, %v1186
        %v1215 = vsub.f32 %v1099, %v1182
        %v1216 = vsub.f32 %v1099, %v1186
        %v1217 = vsub.f32 %v1103, %v1182
        %v1218 = vsub.f32 %v1103, %v1186
        %v1219 = vsub.f32 %v1107, %v1182
        %v1220 = vsub.f32 %v1107, %v1186
        %v1221 = vsub.f32 %v1111, %v1182
        %v1222 = vsub.f32 %v1111, %v1186
        %v1223 = vsub.f32 %v1115, %v1182
        %v1224 = vsub.f32 %v1115, %v1186
        %v1225 = vsub.f32 %v1119, %v1182
        %v1226 = vsub.f32 %v1119, %v1186
        %v1227 = vsub.f32 %v1123, %v1182
        %v1228 = vsub.f32 %v1123, %v1186
        %v1229 = vsub.f32 %v1127, %v1182
        %v1230 = vsub.f32 %v1127, %v1186
        %v1231 = vsub.f32 %v1131, %v1182
        %v1232 = vsub.f32 %v1131, %v1186
        %v1233 = vsub.f32 %v1135, %v1182
        %v1234 = vsub.f32 %v1135, %v1186
        %v1235 = vsub.f32 %v1139, %v1182
        %v1236 = vsub.f32 %v1139, %v1186
        %v1237 = vsub.f32 %v1143, %v1182
        %v1238 = vsub.f32 %v1143, %v1186
        %v1239 = vsub.f32 %v1147, %v1182
        %v1240 = vsub.f32 %v1147, %v1186
        %v1241 = vsub.f32 %v1151, %v1182
        %v1242 = vsub.f32 %v1151, %v1186
        %v1243 = vsub.f32 %v1155, %v1182
        %v1244 = vsub.f32 %v1155, %v1186
        %v1245 = vsub.f32 %v1159, %v1182
        %v1246 = vsub.f32 %v1159, %v1186
        %v1247 = vsub.f32 %v1163, %v1182
        %v1248 = vsub.f32 %v1163, %v1186
        %v1249 = vsub.f32 %v1167, %v1182
        %v1250 = vsub.f32 %v1167, %v1186
        %v1251 = vand.u32 2147483647, %v1187
        %v1252 = vand.u32 2147483647, %v1188
        %v1253 = vand.u32 2147483647, %v1189
        %v1254 = vand.u32 2147483647, %v1190
        %v1255 = vand.u32 2147483647, %v1191
        %v1256 = vand.u32 2147483647, %v1192
        %v1257 = vand.u32 2147483647, %v1193
        %v1258 = vand.u32 2147483647, %v1194
        %v1259 = vand.u32 2147483647, %v1195
        %v1260 = vand.u32 2147483647, %v1196
        %v1261 = vand.u32 2147483647, %v1197
        %v1262 = vand.u32 2147483647, %v1198
        %v1263 = vand.u32 2147483647, %v1199
        %v1264 = vand.u32 2147483647, %v1200
        %v1265 = vand.u32 2147483647, %v1201
        %v1266 = vand.u32 2147483647, %v1202
        %v1267 = vand.u32 2147483647, %v1203
        %v1268 = vand.u32 2147483647, %v1204
        %v1269 = vand.u32 2147483647, %v1205
        %v1270 = vand.u32 2147483647, %v1206
        %v1271 = vand.u32 2147483647, %v1207
        %v1272 = vand.u32 2147483647, %v1208
        %v1273 = vand.u32 2147483647, %v1209
        %v1274 = vand.u32 2147483647, %v1210
        %v1275 = vand.u32 2147483647, %v1211
        %v1276 = vand.u32 2147483647, %v1212
        %v1277 = vand.u32 2147483647, %v1213
        %v1278 = vand.u32 2147483647, %v1214
        %v1279 = vand.u32 2147483647, %v1215
        %v1280 = vand.u32 2147483647, %v1216
        %v1281 = vand.u32 2147483647, %v1217
        %v1282 = vand.u32 2147483647, %v1218
        %v1283 = vand.u32 2147483647, %v1219
        %v1284 = vand.u32 2147483647, %v1220
        %v1285 = vand.u32 2147483647, %v1221
        %v1286 = vand.u32 2147483647, %v1222
        %v1287 = vand.u32 2147483647, %v1223
        %v1288 = vand.u32 2147483647, %v1224
        %v1289 = vand.u32 2147483647, %v1225
        %v1290 = vand.u32 2147483647, %v1226
        %v1291 = vand.u32 2147483647, %v1227
        %v1292 = vand.u32 2147483647, %v1228
        %v1293 = vand.u32 2147483647, %v1229
        %v1294 = vand.u32 2147483647, %v1230
        %v1295 = vand.u32 2147483647, %v1231
        %v1296 = vand.u32 2147483647, %v1232
        %v1297 = vand.u32 2147483647, %v1233
        %v1298 = vand.u32 2147483647, %v1234
        %v1299 = vand.u32 2147483647, %v1235
        %v1300 = vand.u32 2147483647, %v1236
        %v1301 = vand.u32 2147483647, %v1237
        %v1302 = vand.u32 2147483647, %v1238
        %v1303 = vand.u32 2147483647, %v1239
        %v1304 = vand.u32 2147483647, %v1240
        %v1305 = vand.u32 2147483647, %v1241
        %v1306 = vand.u32 2147483647, %v1242
        %v1307 = vand.u32 2147483647, %v1243
        %v1308 = vand.u32 2147483647, %v1244
        %v1309 = vand.u32 2147483647, %v1245
        %v1310 = vand.u32 2147483647, %v1246
        %v1311 = vand.u32 2147483647, %v1247
        %v1312 = vand.u32 2147483647, %v1248
        %v1313 = vand.u32 2147483647, %v1249
        %v1314 = vand.u32 2147483647, %v1250
        %v1315 = vstv %s297
        %v1316 = vmul.f32 %v1315, %v1251
        %v1317 = vmul.f32 %v1315, %v1252
        %v1318 = vmul.f32 %v1315, %v1253
        %v1319 = vmul.f32 %v1315, %v1254
        %v1320 = vmul.f32 %v1315, %v1255
        %v1321 = vmul.f32 %v1315, %v1256
        %v1322 = vmul.f32 %v1315, %v1257
        %v1323 = vmul.f32 %v1315, %v1258
        %v1324 = vmul.f32 %v1315, %v1259
        %v1325 = vmul.f32 %v1315, %v1260
        %v1326 = vmul.f32 %v1315, %v1261
        %v1327 = vmul.f32 %v1315, %v1262
        %v1328 = vmul.f32 %v1315, %v1263
        %v1329 = vmul.f32 %v1315, %v1264
        %v1330 = vmul.f32 %v1315, %v1265
        %v1331 = vmul.f32 %v1315, %v1266
        %v1332 = vmul.f32 %v1315, %v1267
        %v1333 = vmul.f32 %v1315, %v1268
        %v1334 = vmul.f32 %v1315, %v1269
        %v1335 = vmul.f32 %v1315, %v1270
        %v1336 = vmul.f32 %v1315, %v1271
        %v1337 = vmul.f32 %v1315, %v1272
        %v1338 = vmul.f32 %v1315, %v1273
        %v1339 = vmul.f32 %v1315, %v1274
        %v1340 = vmul.f32 %v1315, %v1275
        %v1341 = vmul.f32 %v1315, %v1276
        %v1342 = vmul.f32 %v1315, %v1277
        %v1343 = vmul.f32 %v1315, %v1278
        %v1344 = vmul.f32 %v1315, %v1279
        %v1345 = vmul.f32 %v1315, %v1280
        %v1346 = vmul.f32 %v1315, %v1281
        %v1347 = vmul.f32 %v1315, %v1282
        %v1348 = vmul.f32 %v1315, %v1283
        %v1349 = vmul.f32 %v1315, %v1284
        %v1350 = vmul.f32 %v1315, %v1285
        %v1351 = vmul.f32 %v1315, %v1286
        %v1352 = vmul.f32 %v1315, %v1287
        %v1353 = vmul.f32 %v1315, %v1288
        %v1354 = vmul.f32 %v1315, %v1289
        %v1355 = vmul.f32 %v1315, %v1290
        %v1356 = vmul.f32 %v1315, %v1291
        %v1357 = vmul.f32 %v1315, %v1292
        %v1358 = vmul.f32 %v1315, %v1293
        %v1359 = vmul.f32 %v1315, %v1294
        %v1360 = vmul.f32 %v1315, %v1295
        %v1361 = vmul.f32 %v1315, %v1296
        %v1362 = vmul.f32 %v1315, %v1297
        %v1363 = vmul.f32 %v1315, %v1298
        %v1364 = vmul.f32 %v1315, %v1299
        %v1365 = vmul.f32 %v1315, %v1300
        %v1366 = vmul.f32 %v1315, %v1301
        %v1367 = vmul.f32 %v1315, %v1302
        %v1368 = vmul.f32 %v1315, %v1303
        %v1369 = vmul.f32 %v1315, %v1304
        %v1370 = vmul.f32 %v1315, %v1305
        %v1371 = vmul.f32 %v1315, %v1306
        %v1372 = vmul.f32 %v1315, %v1307
        %v1373 = vmul.f32 %v1315, %v1308
        %v1374 = vmul.f32 %v1315, %v1309
        %v1375 = vmul.f32 %v1315, %v1310
        %v1376 = vmul.f32 %v1315, %v1311
        %v1377 = vmul.f32 %v1315, %v1312
        %v1378 = vmul.f32 %v1315, %v1313
        %v1379 = vmul.f32 %v1315, %v1314
        %v1380 = vadd.f32 %v977, %v1316
        %v1381 = vadd.f32 %v978, %v1317
        %v1382 = vadd.f32 %v979, %v1318
        %v1383 = vadd.f32 %v980, %v1319
        %v1384 = vadd.f32 %v981, %v1320
        %v1385 = vadd.f32 %v982, %v1321
        %v1386 = vadd.f32 %v983, %v1322
        %v1387 = vadd.f32 %v984, %v1323
        %v1388 = vadd.f32 %v985, %v1324
        %v1389 = vadd.f32 %v986, %v1325
        %v1390 = vadd.f32 %v987, %v1326
        %v1391 = vadd.f32 %v988, %v1327
        %v1392 = vadd.f32 %v989, %v1328
        %v1393 = vadd.f32 %v990, %v1329
        %v1394 = vadd.f32 %v991, %v1330
        %v1395 = vadd.f32 %v992, %v1331
        %v1396 = vadd.f32 %v993, %v1332
        %v1397 = vadd.f32 %v994, %v1333
        %v1398 = vadd.f32 %v995, %v1334
        %v1399 = vadd.f32 %v996, %v1335
        %v1400 = vadd.f32 %v997, %v1336
        %v1401 = vadd.f32 %v998, %v1337
        %v1402 = vadd.f32 %v999, %v1338
        %v1403 = vadd.f32 %v1000, %v1339
        %v1404 = vadd.f32 %v1001, %v1340
        %v1405 = vadd.f32 %v1002, %v1341
        %v1406 = vadd.f32 %v1003, %v1342
        %v1407 = vadd.f32 %v1004, %v1343
        %v1408 = vadd.f32 %v1005, %v1344
        %v1409 = vadd.f32 %v1006, %v1345
        %v1410 = vadd.f32 %v1007, %v1346
        %v1411 = vadd.f32 %v1008, %v1347
        %v1412 = vadd.f32 %v1009, %v1348
        %v1413 = vadd.f32 %v1010, %v1349
        %v1414 = vadd.f32 %v1011, %v1350
        %v1415 = vadd.f32 %v1012, %v1351
        %v1416 = vadd.f32 %v1013, %v1352
        %v1417 = vadd.f32 %v1014, %v1353
        %v1418 = vadd.f32 %v1015, %v1354
        %v1419 = vadd.f32 %v1016, %v1355
        %v1420 = vadd.f32 %v1017, %v1356
        %v1421 = vadd.f32 %v1018, %v1357
        %v1422 = vadd.f32 %v1019, %v1358
        %v1423 = vadd.f32 %v1020, %v1359
        %v1424 = vadd.f32 %v1021, %v1360
        %v1425 = vadd.f32 %v1022, %v1361
        %v1426 = vadd.f32 %v1023, %v1362
        %v1427 = vadd.f32 %v1024, %v1363
        %v1428 = vadd.f32 %v1025, %v1364
        %v1429 = vadd.f32 %v1026, %v1365
        %v1430 = vadd.f32 %v1027, %v1366
        %v1431 = vadd.f32 %v1028, %v1367
        %v1432 = vadd.f32 %v1029, %v1368
        %v1433 = vadd.f32 %v1030, %v1369
        %v1434 = vadd.f32 %v1031, %v1370
        %v1435 = vadd.f32 %v1032, %v1371
        %v1436 = vadd.f32 %v1033, %v1372
        %v1437 = vadd.f32 %v1034, %v1373
        %v1438 = vadd.f32 %v1035, %v1374
        %v1439 = vadd.f32 %v1036, %v1375
        %v1440 = vadd.f32 %v1037, %v1376
        %v1441 = vadd.f32 %v1038, %v1377
        %v1442 = vadd.f32 %v1039, %v1378
        %v1443 = vadd.f32 %v1040, %v1379
        %1444 = vst [vmem:[#allocation2] sm:$0xff] %v1380
        %1445 = vst [vmem:[#allocation2 + $0x8] sm:$0xff] %v1381
        %1446 = vst [vmem:[#allocation2 + $0x10] sm:$0xff] %v1382
        %1447 = vst [vmem:[#allocation2 + $0x18] sm:$0xff] %v1383
        %1448 = vst [vmem:[#allocation2 + $0x20] sm:$0xff] %v1384
        %1449 = vst [vmem:[#allocation2 + $0x28] sm:$0xff] %v1385
        %1450 = vst [vmem:[#allocation2 + $0x30] sm:$0xff] %v1386
        %1451 = vst [vmem:[#allocation2 + $0x38] sm:$0xff] %v1387
        %1452 = vst [vmem:[#allocation2 + $0x40] sm:$0xff] %v1388
        %1453 = vst [vmem:[#allocation2 + $0x48] sm:$0xff] %v1389
        %1454 = vst [vmem:[#allocation2 + $0x50] sm:$0xff] %v1390
        %1455 = vst [vmem:[#allocation2 + $0x58] sm:$0xff] %v1391
        %1456 = vst [vmem:[#allocation2 + $0x60] sm:$0xff] %v1392
        %1457 = vst [vmem:[#allocation2 + $0x68] sm:$0xff] %v1393
        %1458 = vst [vmem:[#allocation2 + $0x70] sm:$0xff] %v1394
        %1459 = vst [vmem:[#allocation2 + $0x78] sm:$0xff] %v1395
        %1460 = vst [vmem:[#allocation2 + $0x80] sm:$0xff] %v1396
        %1461 = vst [vmem:[#allocation2 + $0x88] sm:$0xff] %v1397
        %1462 = vst [vmem:[#allocation2 + $0x90] sm:$0xff] %v1398
        %1463 = vst [vmem:[#allocation2 + $0x98] sm:$0xff] %v1399
        %1464 = vst [vmem:[#allocation2 + $0xa0] sm:$0xff] %v1400
        %1465 = vst [vmem:[#allocation2 + $0xa8] sm:$0xff] %v1401
        %1466 = vst [vmem:[#allocation2 + $0xb0] sm:$0xff] %v1402
        %1467 = vst [vmem:[#allocation2 + $0xb8] sm:$0xff] %v1403
        %1468 = vst [vmem:[#allocation2 + $0xc0] sm:$0xff] %v1404
        %1469 = vst [vmem:[#allocation2 + $0xc8] sm:$0xff] %v1405
        %1470 = vst [vmem:[#allocation2 + $0xd0] sm:$0xff] %v1406
        %1471 = vst [vmem:[#allocation2 + $0xd8] sm:$0xff] %v1407
        %1472 = vst [vmem:[#allocation2 + $0xe0] sm:$0xff] %v1408
        %1473 = vst [vmem:[#allocation2 + $0xe8] sm:$0xff] %v1409
        %1474 = vst [vmem:[#allocation2 + $0xf0] sm:$0xff] %v1410
        %1475 = vst [vmem:[#allocation2 + $0xf8] sm:$0xff] %v1411
        %1476 = vst [vmem:[#allocation2 + $0x100] sm:$0xff] %v1412
        %1477 = vst [vmem:[#allocation2 + $0x108] sm:$0xff] %v1413
        %1478 = vst [vmem:[#allocation2 + $0x110] sm:$0xff] %v1414
        %1479 = vst [vmem:[#allocation2 + $0x118] sm:$0xff] %v1415
        %1480 = vst [vmem:[#allocation2 + $0x120] sm:$0xff] %v1416
        %1481 = vst [vmem:[#allocation2 + $0x128] sm:$0xff] %v1417
        %1482 = vst [vmem:[#allocation2 + $0x130] sm:$0xff] %v1418
        %1483 = vst [vmem:[#allocation2 + $0x138] sm:$0xff] %v1419
        %1484 = vst [vmem:[#allocation2 + $0x140] sm:$0xff] %v1420
        %1485 = vst [vmem:[#allocation2 + $0x148] sm:$0xff] %v1421
        %1486 = vst [vmem:[#allocation2 + $0x150] sm:$0xff] %v1422
        %1487 = vst [vmem:[#allocation2 + $0x158] sm:$0xff] %v1423
        %1488 = vst [vmem:[#allocation2 + $0x160] sm:$0xff] %v1424
        %1489 = vst [vmem:[#allocation2 + $0x168] sm:$0xff] %v1425
        %1490 = vst [vmem:[#allocation2 + $0x170] sm:$0xff] %v1426
        %1491 = vst [vmem:[#allocation2 + $0x178] sm:$0xff] %v1427
        %1492 = vst [vmem:[#allocation2 + $0x180] sm:$0xff] %v1428
        %1493 = vst [vmem:[#allocation2 + $0x188] sm:$0xff] %v1429
        %1494 = vst [vmem:[#allocation2 + $0x190] sm:$0xff] %v1430
        %1495 = vst [vmem:[#allocation2 + $0x198] sm:$0xff] %v1431
        %1496 = vst [vmem:[#allocation2 + $0x1a0] sm:$0xff] %v1432
        %1497 = vst [vmem:[#allocation2 + $0x1a8] sm:$0xff] %v1433
        %1498 = vst [vmem:[#allocation2 + $0x1b0] sm:$0xff] %v1434
        %1499 = vst [vmem:[#allocation2 + $0x1b8] sm:$0xff] %v1435
        %1500 = vst [vmem:[#allocation2 + $0x1c0] sm:$0xff] %v1436
        %1501 = vst [vmem:[#allocation2 + $0x1c8] sm:$0xff] %v1437
        %1502 = vst [vmem:[#allocation2 + $0x1d0] sm:$0xff] %v1438
        %1503 = vst [vmem:[#allocation2 + $0x1d8] sm:$0xff] %v1439
        %1504 = vst [vmem:[#allocation2 + $0x1e0] sm:$0xff] %v1440
        %1505 = vst [vmem:[#allocation2 + $0x1e8] sm:$0xff] %v1441
        %1506 = vst [vmem:[#allocation2 + $0x1f0] sm:$0xff] %v1442
        %1507 = vst [vmem:[#allocation2 + $0x1f8] sm:$0xff] %v1443
        %v1508 = vld [vmem:[#allocation2] sm:$0xff]
        %v1509 = vld [vmem:[#allocation2 + $0x8] sm:$0xff]
        %v1510 = vld [vmem:[#allocation2 + $0x10] sm:$0xff]
        %v1511 = vld [vmem:[#allocation2 + $0x18] sm:$0xff]
        %v1512 = vld [vmem:[#allocation2 + $0x20] sm:$0xff]
        %v1513 = vld [vmem:[#allocation2 + $0x28] sm:$0xff]
        %v1514 = vld [vmem:[#allocation2 + $0x30] sm:$0xff]
        %v1515 = vld [vmem:[#allocation2 + $0x38] sm:$0xff]
        %v1516 = vld [vmem:[#allocation2 + $0x40] sm:$0xff]
        %v1517 = vld [vmem:[#allocation2 + $0x48] sm:$0xff]
        %v1518 = vld [vmem:[#allocation2 + $0x50] sm:$0xff]
        %v1519 = vld [vmem:[#allocation2 + $0x58] sm:$0xff]
        %v1520 = vld [vmem:[#allocation2 + $0x60] sm:$0xff]
        %v1521 = vld [vmem:[#allocation2 + $0x68] sm:$0xff]
        %v1522 = vld [vmem:[#allocation2 + $0x70] sm:$0xff]
        %v1523 = vld [vmem:[#allocation2 + $0x78] sm:$0xff]
        %v1524 = vld [vmem:[#allocation2 + $0x80] sm:$0xff]
        %v1525 = vld [vmem:[#allocation2 + $0x88] sm:$0xff]
        %v1526 = vld [vmem:[#allocation2 + $0x90] sm:$0xff]
        %v1527 = vld [vmem:[#allocation2 + $0x98] sm:$0xff]
        %v1528 = vld [vmem:[#allocation2 + $0xa0] sm:$0xff]
        %v1529 = vld [vmem:[#allocation2 + $0xa8] sm:$0xff]
        %v1530 = vld [vmem:[#allocation2 + $0xb0] sm:$0xff]
        %v1531 = vld [vmem:[#allocation2 + $0xb8] sm:$0xff]
        %v1532 = vld [vmem:[#allocation2 + $0xc0] sm:$0xff]
        %v1533 = vld [vmem:[#allocation2 + $0xc8] sm:$0xff]
        %v1534 = vld [vmem:[#allocation2 + $0xd0] sm:$0xff]
        %v1535 = vld [vmem:[#allocation2 + $0xd8] sm:$0xff]
        %v1536 = vld [vmem:[#allocation2 + $0xe0] sm:$0xff]
        %v1537 = vld [vmem:[#allocation2 + $0xe8] sm:$0xff]
        %v1538 = vld [vmem:[#allocation2 + $0xf0] sm:$0xff]
        %v1539 = vld [vmem:[#allocation2 + $0xf8] sm:$0xff]
        %v1540 = vld [vmem:[#allocation2 + $0x100] sm:$0xff]
        %v1541 = vld [vmem:[#allocation2 + $0x108] sm:$0xff]
        %v1542 = vld [vmem:[#allocation2 + $0x110] sm:$0xff]
        %v1543 = vld [vmem:[#allocation2 + $0x118] sm:$0xff]
        %v1544 = vld [vmem:[#allocation2 + $0x120] sm:$0xff]
        %v1545 = vld [vmem:[#allocation2 + $0x128] sm:$0xff]
        %v1546 = vld [vmem:[#allocation2 + $0x130] sm:$0xff]
        %v1547 = vld [vmem:[#allocation2 + $0x138] sm:$0xff]
        %v1548 = vld [vmem:[#allocation2 + $0x140] sm:$0xff]
        %v1549 = vld [vmem:[#allocation2 + $0x148] sm:$0xff]
        %v1550 = vld [vmem:[#allocation2 + $0x150] sm:$0xff]
        %v1551 = vld [vmem:[#allocation2 + $0x158] sm:$0xff]
        %v1552 = vld [vmem:[#allocation2 + $0x160] sm:$0xff]
        %v1553 = vld [vmem:[#allocation2 + $0x168] sm:$0xff]
        %v1554 = vld [vmem:[#allocation2 + $0x170] sm:$0xff]
        %v1555 = vld [vmem:[#allocation2 + $0x178] sm:$0xff]
        %v1556 = vld [vmem:[#allocation2 + $0x180] sm:$0xff]
        %v1557 = vld [vmem:[#allocation2 + $0x188] sm:$0xff]
        %v1558 = vld [vmem:[#allocation2 + $0x190] sm:$0xff]
        %v1559 = vld [vmem:[#allocation2 + $0x198] sm:$0xff]
        %v1560 = vld [vmem:[#allocation2 + $0x1a0] sm:$0xff]
        %v1561 = vld [vmem:[#allocation2 + $0x1a8] sm:$0xff]
        %v1562 = vld [vmem:[#allocation2 + $0x1b0] sm:$0xff]
        %v1563 = vld [vmem:[#allocation2 + $0x1b8] sm:$0xff]
        %v1564 = vld [vmem:[#allocation2 + $0x1c0] sm:$0xff]
        %v1565 = vld [vmem:[#allocation2 + $0x1c8] sm:$0xff]
        %v1566 = vld [vmem:[#allocation2 + $0x1d0] sm:$0xff]
        %v1567 = vld [vmem:[#allocation2 + $0x1d8] sm:$0xff]
        %v1568 = vld [vmem:[#allocation2 + $0x1e0] sm:$0xff]
        %v1569 = vld [vmem:[#allocation2 + $0x1e8] sm:$0xff]
        %v1570 = vld [vmem:[#allocation2 + $0x1f0] sm:$0xff]
        %v1571 = vld [vmem:[#allocation2 + $0x1f8] sm:$0xff]
        %s1572 = sld [smem:[#allocation6]]
        %v1573 = vstv %s1572
        %v1574 = vmul.f32 %v1508, %v1573
        %v1575 = vmul.f32 %v1509, %v1573
        %v1576 = vmul.f32 %v1510, %v1573
        %v1577 = vmul.f32 %v1511, %v1573
        %v1578 = vmul.f32 %v1512, %v1573
        %v1579 = vmul.f32 %v1513, %v1573
        %v1580 = vmul.f32 %v1514, %v1573
        %v1581 = vmul.f32 %v1515, %v1573
        %v1582 = vmul.f32 %v1516, %v1573
        %v1583 = vmul.f32 %v1517, %v1573
        %v1584 = vmul.f32 %v1518, %v1573
        %v1585 = vmul.f32 %v1519, %v1573
        %v1586 = vmul.f32 %v1520, %v1573
        %v1587 = vmul.f32 %v1521, %v1573
        %v1588 = vmul.f32 %v1522, %v1573
        %v1589 = vmul.f32 %v1523, %v1573
        %v1590 = vmul.f32 %v1524, %v1573
        %v1591 = vmul.f32 %v1525, %v1573
        %v1592 = vmul.f32 %v1526, %v1573
        %v1593 = vmul.f32 %v1527, %v1573
        %v1594 = vmul.f32 %v1528, %v1573
        %v1595 = vmul.f32 %v1529, %v1573
        %v1596 = vmul.f32 %v1530, %v1573
        %v1597 = vmul.f32 %v1531, %v1573
        %v1598 = vmul.f32 %v1532, %v1573
        %v1599 = vmul.f32 %v1533, %v1573
        %v1600 = vmul.f32 %v1534, %v1573
        %v1601 = vmul.f32 %v1535, %v1573
        %v1602 = vmul.f32 %v1536, %v1573
        %v1603 = vmul.f32 %v1537, %v1573
        %v1604 = vmul.f32 %v1538, %v1573
        %v1605 = vmul.f32 %v1539, %v1573
        %v1606 = vmul.f32 %v1540, %v1573
        %v1607 = vmul.f32 %v1541, %v1573
        %v1608 = vmul.f32 %v1542, %v1573
        %v1609 = vmul.f32 %v1543, %v1573
        %v1610 = vmul.f32 %v1544, %v1573
        %v1611 = vmul.f32 %v1545, %v1573
        %v1612 = vmul.f32 %v1546, %v1573
        %v1613 = vmul.f32 %v1547, %v1573
        %v1614 = vmul.f32 %v1548, %v1573
        %v1615 = vmul.f32 %v1549, %v1573
        %v1616 = vmul.f32 %v1550, %v1573
        %v1617 = vmul.f32 %v1551, %v1573
        %v1618 = vmul.f32 %v1552, %v1573
        %v1619 = vmul.f32 %v1553, %v1573
        %v1620 = vmul.f32 %v1554, %v1573
        %v1621 = vmul.f32 %v1555, %v1573
        %v1622 = vmul.f32 %v1556, %v1573
        %v1623 = vmul.f32 %v1557, %v1573
        %v1624 = vmul.f32 %v1558, %v1573
        %v1625 = vmul.f32 %v1559, %v1573
        %v1626 = vmul.f32 %v1560, %v1573
        %v1627 = vmul.f32 %v1561, %v1573
        %v1628 = vmul.f32 %v1562, %v1573
        %v1629 = vmul.f32 %v1563, %v1573
        %v1630 = vmul.f32 %v1564, %v1573
        %v1631 = vmul.f32 %v1565, %v1573
        %v1632 = vmul.f32 %v1566, %v1573
        %v1633 = vmul.f32 %v1567, %v1573
        %v1634 = vmul.f32 %v1568, %v1573
        %v1635 = vmul.f32 %v1569, %v1573
        %v1636 = vmul.f32 %v1570, %v1573
        %v1637 = vmul.f32 %v1571, %v1573
        %1638 = vst [vmem:[%s273] sm:$0xff] %v1574
        %1639 = vst [vmem:[%s273 + $0x8] sm:$0xff] %v1575
        %1640 = vst [vmem:[%s273 + $0x10] sm:$0xff] %v1576
        %1641 = vst [vmem:[%s273 + $0x18] sm:$0xff] %v1577
        %1642 = vst [vmem:[%s273 + $0x20] sm:$0xff] %v1578
        %1643 = vst [vmem:[%s273 + $0x28] sm:$0xff] %v1579
        %1644 = vst [vmem:[%s273 + $0x30] sm:$0xff] %v1580
        %1645 = vst [vmem:[%s273 + $0x38] sm:$0xff] %v1581
        %1646 = vst [vmem:[%s273 + $0x40] sm:$0xff] %v1582
        %1647 = vst [vmem:[%s273 + $0x48] sm:$0xff] %v1583
        %1648 = vst [vmem:[%s273 + $0x50] sm:$0xff] %v1584
        %1649 = vst [vmem:[%s273 + $0x58] sm:$0xff] %v1585
        %1650 = vst [vmem:[%s273 + $0x60] sm:$0xff] %v1586
        %1651 = vst [vmem:[%s273 + $0x68] sm:$0xff] %v1587
        %1652 = vst [vmem:[%s273 + $0x70] sm:$0xff] %v1588
        %1653 = vst [vmem:[%s273 + $0x78] sm:$0xff] %v1589
        %1654 = vst [vmem:[%s273 + $0x80] sm:$0xff] %v1590
        %1655 = vst [vmem:[%s273 + $0x88] sm:$0xff] %v1591
        %1656 = vst [vmem:[%s273 + $0x90] sm:$0xff] %v1592
        %1657 = vst [vmem:[%s273 + $0x98] sm:$0xff] %v1593
        %1658 = vst [vmem:[%s273 + $0xa0] sm:$0xff] %v1594
        %1659 = vst [vmem:[%s273 + $0xa8] sm:$0xff] %v1595
        %1660 = vst [vmem:[%s273 + $0xb0] sm:$0xff] %v1596
        %1661 = vst [vmem:[%s273 + $0xb8] sm:$0xff] %v1597
        %1662 = vst [vmem:[%s273 + $0xc0] sm:$0xff] %v1598
        %1663 = vst [vmem:[%s273 + $0xc8] sm:$0xff] %v1599
        %1664 = vst [vmem:[%s273 + $0xd0] sm:$0xff] %v1600
        %1665 = vst [vmem:[%s273 + $0xd8] sm:$0xff] %v1601
        %1666 = vst [vmem:[%s273 + $0xe0] sm:$0xff] %v1602
        %1667 = vst [vmem:[%s273 + $0xe8] sm:$0xff] %v1603
        %1668 = vst [vmem:[%s273 + $0xf0] sm:$0xff] %v1604
        %1669 = vst [vmem:[%s273 + $0xf8] sm:$0xff] %v1605
        %1670 = vst [vmem:[%s273 + $0x100] sm:$0xff] %v1606
        %1671 = vst [vmem:[%s273 + $0x108] sm:$0xff] %v1607
        %1672 = vst [vmem:[%s273 + $0x110] sm:$0xff] %v1608
        %1673 = vst [vmem:[%s273 + $0x118] sm:$0xff] %v1609
        %1674 = vst [vmem:[%s273 + $0x120] sm:$0xff] %v1610
        %1675 = vst [vmem:[%s273 + $0x128] sm:$0xff] %v1611
        %1676 = vst [vmem:[%s273 + $0x130] sm:$0xff] %v1612
        %1677 = vst [vmem:[%s273 + $0x138] sm:$0xff] %v1613
        %1678 = vst [vmem:[%s273 + $0x140] sm:$0xff] %v1614
        %1679 = vst [vmem:[%s273 + $0x148] sm:$0xff] %v1615
        %1680 = vst [vmem:[%s273 + $0x150] sm:$0xff] %v1616
        %1681 = vst [vmem:[%s273 + $0x158] sm:$0xff] %v1617
        %1682 = vst [vmem:[%s273 + $0x160] sm:$0xff] %v1618
        %1683 = vst [vmem:[%s273 + $0x168] sm:$0xff] %v1619
        %1684 = vst [vmem:[%s273 + $0x170] sm:$0xff] %v1620
        %1685 = vst [vmem:[%s273 + $0x178] sm:$0xff] %v1621
        %1686 = vst [vmem:[%s273 + $0x180] sm:$0xff] %v1622
        %1687 = vst [vmem:[%s273 + $0x188] sm:$0xff] %v1623
        %1688 = vst [vmem:[%s273 + $0x190] sm:$0xff] %v1624
        %1689 = vst [vmem:[%s273 + $0x198] sm:$0xff] %v1625
        %1690 = vst [vmem:[%s273 + $0x1a0] sm:$0xff] %v1626
        %1691 = vst [vmem:[%s273 + $0x1a8] sm:$0xff] %v1627
        %1692 = vst [vmem:[%s273 + $0x1b0] sm:$0xff] %v1628
        %1693 = vst [vmem:[%s273 + $0x1b8] sm:$0xff] %v1629
        %1694 = vst [vmem:[%s273 + $0x1c0] sm:$0xff] %v1630
        %1695 = vst [vmem:[%s273 + $0x1c8] sm:$0xff] %v1631
        %1696 = vst [vmem:[%s273 + $0x1d0] sm:$0xff] %v1632
        %1697 = vst [vmem:[%s273 + $0x1d8] sm:$0xff] %v1633
        %1698 = vst [vmem:[%s273 + $0x1e0] sm:$0xff] %v1634
        %1699 = vst [vmem:[%s273 + $0x1e8] sm:$0xff] %v1635
        %1700 = vst [vmem:[%s273 + $0x1f0] sm:$0xff] %v1636
        %1701 = vst [vmem:[%s273 + $0x1f8] sm:$0xff] %v1637
        %v1702 = vld [vmem:[#allocation2] sm:$0xff]
        %v1703 = vld [vmem:[#allocation2 + $0x8] sm:$0xff]
        %v1704 = vld [vmem:[#allocation2 + $0x10] sm:$0xff]
        %v1705 = vld [vmem:[#allocation2 + $0x18] sm:$0xff]
        %v1706 = vld [vmem:[#allocation2 + $0x20] sm:$0xff]
        %v1707 = vld [vmem:[#allocation2 + $0x28] sm:$0xff]
        %v1708 = vld [vmem:[#allocation2 + $0x30] sm:$0xff]
        %v1709 = vld [vmem:[#allocation2 + $0x38] sm:$0xff]
        %v1710 = vld [vmem:[#allocation2 + $0x40] sm:$0xff]
        %v1711 = vld [vmem:[#allocation2 + $0x48] sm:$0xff]
        %v1712 = vld [vmem:[#allocation2 + $0x50] sm:$0xff]
        %v1713 = vld [vmem:[#allocation2 + $0x58] sm:$0xff]
        %v1714 = vld [vmem:[#allocation2 + $0x60] sm:$0xff]
        %v1715 = vld [vmem:[#allocation2 + $0x68] sm:$0xff]
        %v1716 = vld [vmem:[#allocation2 + $0x70] sm:$0xff]
        %v1717 = vld [vmem:[#allocation2 + $0x78] sm:$0xff]
        %v1718 = vld [vmem:[#allocation2 + $0x80] sm:$0xff]
        %v1719 = vld [vmem:[#allocation2 + $0x88] sm:$0xff]
        %v1720 = vld [vmem:[#allocation2 + $0x90] sm:$0xff]
        %v1721 = vld [vmem:[#allocation2 + $0x98] sm:$0xff]
        %v1722 = vld [vmem:[#allocation2 + $0xa0] sm:$0xff]
        %v1723 = vld [vmem:[#allocation2 + $0xa8] sm:$0xff]
        %v1724 = vld [vmem:[#allocation2 + $0xb0] sm:$0xff]
        %v1725 = vld [vmem:[#allocation2 + $0xb8] sm:$0xff]
        %v1726 = vld [vmem:[#allocation2 + $0xc0] sm:$0xff]
        %v1727 = vld [vmem:[#allocation2 + $0xc8] sm:$0xff]
        %v1728 = vld [vmem:[#allocation2 + $0xd0] sm:$0xff]
        %v1729 = vld [vmem:[#allocation2 + $0xd8] sm:$0xff]
        %v1730 = vld [vmem:[#allocation2 + $0xe0] sm:$0xff]
        %v1731 = vld [vmem:[#allocation2 + $0xe8] sm:$0xff]
        %v1732 = vld [vmem:[#allocation2 + $0xf0] sm:$0xff]
        %v1733 = vld [vmem:[#allocation2 + $0xf8] sm:$0xff]
        %v1734 = vld [vmem:[#allocation2 + $0x100] sm:$0xff]
        %v1735 = vld [vmem:[#allocation2 + $0x108] sm:$0xff]
        %v1736 = vld [vmem:[#allocation2 + $0x110] sm:$0xff]
        %v1737 = vld [vmem:[#allocation2 + $0x118] sm:$0xff]
        %v1738 = vld [vmem:[#allocation2 + $0x120] sm:$0xff]
        %v1739 = vld [vmem:[#allocation2 + $0x128] sm:$0xff]
        %v1740 = vld [vmem:[#allocation2 + $0x130] sm:$0xff]
        %v1741 = vld [vmem:[#allocation2 + $0x138] sm:$0xff]
        %v1742 = vld [vmem:[#allocation2 + $0x140] sm:$0xff]
        %v1743 = vld [vmem:[#allocation2 + $0x148] sm:$0xff]
        %v1744 = vld [vmem:[#allocation2 + $0x150] sm:$0xff]
        %v1745 = vld [vmem:[#allocation2 + $0x158] sm:$0xff]
        %v1746 = vld [vmem:[#allocation2 + $0x160] sm:$0xff]
        %v1747 = vld [vmem:[#allocation2 + $0x168] sm:$0xff]
        %v1748 = vld [vmem:[#allocation2 + $0x170] sm:$0xff]
        %v1749 = vld [vmem:[#allocation2 + $0x178] sm:$0xff]
        %v1750 = vld [vmem:[#allocation2 + $0x180] sm:$0xff]
        %v1751 = vld [vmem:[#allocation2 + $0x188] sm:$0xff]
        %v1752 = vld [vmem:[#allocation2 + $0x190] sm:$0xff]
        %v1753 = vld [vmem:[#allocation2 + $0x198] sm:$0xff]
        %v1754 = vld [vmem:[#allocation2 + $0x1a0] sm:$0xff]
        %v1755 = vld [vmem:[#allocation2 + $0x1a8] sm:$0xff]
        %v1756 = vld [vmem:[#allocation2 + $0x1b0] sm:$0xff]
        %v1757 = vld [vmem:[#allocation2 + $0x1b8] sm:$0xff]
        %v1758 = vld [vmem:[#allocation2 + $0x1c0] sm:$0xff]
        %v1759 = vld [vmem:[#allocation2 + $0x1c8] sm:$0xff]
        %v1760 = vld [vmem:[#allocation2 + $0x1d0] sm:$0xff]
        %v1761 = vld [vmem:[#allocation2 + $0x1d8] sm:$0xff]
        %v1762 = vld [vmem:[#allocation2 + $0x1e0] sm:$0xff]
        %v1763 = vld [vmem:[#allocation2 + $0x1e8] sm:$0xff]
        %v1764 = vld [vmem:[#allocation2 + $0x1f0] sm:$0xff]
        %v1765 = vld [vmem:[#allocation2 + $0x1f8] sm:$0xff]
        %s1766 = sld [smem:[#allocation6 + $0x1]]
        %v1767 = vstv %s1766
        %v1768 = vmul.f32 %v1702, %v1767
        %v1769 = vmul.f32 %v1703, %v1767
        %v1770 = vmul.f32 %v1704, %v1767
        %v1771 = vmul.f32 %v1705, %v1767
        %v1772 = vmul.f32 %v1706, %v1767
        %v1773 = vmul.f32 %v1707, %v1767
        %v1774 = vmul.f32 %v1708, %v1767
        %v1775 = vmul.f32 %v1709, %v1767
        %v1776 = vmul.f32 %v1710, %v1767
        %v1777 = vmul.f32 %v1711, %v1767
        %v1778 = vmul.f32 %v1712, %v1767
        %v1779 = vmul.f32 %v1713, %v1767
        %v1780 = vmul.f32 %v1714, %v1767
        %v1781 = vmul.f32 %v1715, %v1767
        %v1782 = vmul.f32 %v1716, %v1767
        %v1783 = vmul.f32 %v1717, %v1767
        %v1784 = vmul.f32 %v1718, %v1767
        %v1785 = vmul.f32 %v1719, %v1767
        %v1786 = vmul.f32 %v1720, %v1767
        %v1787 = vmul.f32 %v1721, %v1767
        %v1788 = vmul.f32 %v1722, %v1767
        %v1789 = vmul.f32 %v1723, %v1767
        %v1790 = vmul.f32 %v1724, %v1767
        %v1791 = vmul.f32 %v1725, %v1767
        %v1792 = vmul.f32 %v1726, %v1767
        %v1793 = vmul.f32 %v1727, %v1767
        %v1794 = vmul.f32 %v1728, %v1767
        %v1795 = vmul.f32 %v1729, %v1767
        %v1796 = vmul.f32 %v1730, %v1767
        %v1797 = vmul.f32 %v1731, %v1767
        %v1798 = vmul.f32 %v1732, %v1767
        %v1799 = vmul.f32 %v1733, %v1767
        %v1800 = vmul.f32 %v1734, %v1767
        %v1801 = vmul.f32 %v1735, %v1767
        %v1802 = vmul.f32 %v1736, %v1767
        %v1803 = vmul.f32 %v1737, %v1767
        %v1804 = vmul.f32 %v1738, %v1767
        %v1805 = vmul.f32 %v1739, %v1767
        %v1806 = vmul.f32 %v1740, %v1767
        %v1807 = vmul.f32 %v1741, %v1767
        %v1808 = vmul.f32 %v1742, %v1767
        %v1809 = vmul.f32 %v1743, %v1767
        %v1810 = vmul.f32 %v1744, %v1767
        %v1811 = vmul.f32 %v1745, %v1767
        %v1812 = vmul.f32 %v1746, %v1767
        %v1813 = vmul.f32 %v1747, %v1767
        %v1814 = vmul.f32 %v1748, %v1767
        %v1815 = vmul.f32 %v1749, %v1767
        %v1816 = vmul.f32 %v1750, %v1767
        %v1817 = vmul.f32 %v1751, %v1767
        %v1818 = vmul.f32 %v1752, %v1767
        %v1819 = vmul.f32 %v1753, %v1767
        %v1820 = vmul.f32 %v1754, %v1767
        %v1821 = vmul.f32 %v1755, %v1767
        %v1822 = vmul.f32 %v1756, %v1767
        %v1823 = vmul.f32 %v1757, %v1767
        %v1824 = vmul.f32 %v1758, %v1767
        %v1825 = vmul.f32 %v1759, %v1767
        %v1826 = vmul.f32 %v1760, %v1767
        %v1827 = vmul.f32 %v1761, %v1767
        %v1828 = vmul.f32 %v1762, %v1767
        %v1829 = vmul.f32 %v1763, %v1767
        %v1830 = vmul.f32 %v1764, %v1767
        %v1831 = vmul.f32 %v1765, %v1767
        %s1832 = scalar_lea.vmem %s273, 512 [#allocation8]
        %1833 = vst [vmem:[%s1832] sm:$0xff] %v1768
        %1834 = vst [vmem:[%s1832 + $0x8] sm:$0xff] %v1769
        %1835 = vst [vmem:[%s1832 + $0x10] sm:$0xff] %v1770
        %1836 = vst [vmem:[%s1832 + $0x18] sm:$0xff] %v1771
        %1837 = vst [vmem:[%s1832 + $0x20] sm:$0xff] %v1772
        %1838 = vst [vmem:[%s1832 + $0x28] sm:$0xff] %v1773
        %1839 = vst [vmem:[%s1832 + $0x30] sm:$0xff] %v1774
        %1840 = vst [vmem:[%s1832 + $0x38] sm:$0xff] %v1775
        %1841 = vst [vmem:[%s1832 + $0x40] sm:$0xff] %v1776
        %1842 = vst [vmem:[%s1832 + $0x48] sm:$0xff] %v1777
        %1843 = vst [vmem:[%s1832 + $0x50] sm:$0xff] %v1778
        %1844 = vst [vmem:[%s1832 + $0x58] sm:$0xff] %v1779
        %1845 = vst [vmem:[%s1832 + $0x60] sm:$0xff] %v1780
        %1846 = vst [vmem:[%s1832 + $0x68] sm:$0xff] %v1781
        %1847 = vst [vmem:[%s1832 + $0x70] sm:$0xff] %v1782
        %1848 = vst [vmem:[%s1832 + $0x78] sm:$0xff] %v1783
        %1849 = vst [vmem:[%s1832 + $0x80] sm:$0xff] %v1784
        %1850 = vst [vmem:[%s1832 + $0x88] sm:$0xff] %v1785
        %1851 = vst [vmem:[%s1832 + $0x90] sm:$0xff] %v1786
        %1852 = vst [vmem:[%s1832 + $0x98] sm:$0xff] %v1787
        %1853 = vst [vmem:[%s1832 + $0xa0] sm:$0xff] %v1788
        %1854 = vst [vmem:[%s1832 + $0xa8] sm:$0xff] %v1789
        %1855 = vst [vmem:[%s1832 + $0xb0] sm:$0xff] %v1790
        %1856 = vst [vmem:[%s1832 + $0xb8] sm:$0xff] %v1791
        %1857 = vst [vmem:[%s1832 + $0xc0] sm:$0xff] %v1792
        %1858 = vst [vmem:[%s1832 + $0xc8] sm:$0xff] %v1793
        %1859 = vst [vmem:[%s1832 + $0xd0] sm:$0xff] %v1794
        %1860 = vst [vmem:[%s1832 + $0xd8] sm:$0xff] %v1795
        %1861 = vst [vmem:[%s1832 + $0xe0] sm:$0xff] %v1796
        %1862 = vst [vmem:[%s1832 + $0xe8] sm:$0xff] %v1797
        %1863 = vst [vmem:[%s1832 + $0xf0] sm:$0xff] %v1798
        %1864 = vst [vmem:[%s1832 + $0xf8] sm:$0xff] %v1799
        %1865 = vst [vmem:[%s1832 + $0x100] sm:$0xff] %v1800
        %1866 = vst [vmem:[%s1832 + $0x108] sm:$0xff] %v1801
        %1867 = vst [vmem:[%s1832 + $0x110] sm:$0xff] %v1802
        %1868 = vst [vmem:[%s1832 + $0x118] sm:$0xff] %v1803
        %1869 = vst [vmem:[%s1832 + $0x120] sm:$0xff] %v1804
        %1870 = vst [vmem:[%s1832 + $0x128] sm:$0xff] %v1805
        %1871 = vst [vmem:[%s1832 + $0x130] sm:$0xff] %v1806
        %1872 = vst [vmem:[%s1832 + $0x138] sm:$0xff] %v1807
        %1873 = vst [vmem:[%s1832 + $0x140] sm:$0xff] %v1808
        %1874 = vst [vmem:[%s1832 + $0x148] sm:$0xff] %v1809
        %1875 = vst [vmem:[%s1832 + $0x150] sm:$0xff] %v1810
        %1876 = vst [vmem:[%s1832 + $0x158] sm:$0xff] %v1811
        %1877 = vst [vmem:[%s1832 + $0x160] sm:$0xff] %v1812
        %1878 = vst [vmem:[%s1832 + $0x168] sm:$0xff] %v1813
        %1879 = vst [vmem:[%s1832 + $0x170] sm:$0xff] %v1814
        %1880 = vst [vmem:[%s1832 + $0x178] sm:$0xff] %v1815
        %1881 = vst [vmem:[%s1832 + $0x180] sm:$0xff] %v1816
        %1882 = vst [vmem:[%s1832 + $0x188] sm:$0xff] %v1817
        %1883 = vst [vmem:[%s1832 + $0x190] sm:$0xff] %v1818
        %1884 = vst [vmem:[%s1832 + $0x198] sm:$0xff] %v1819
        %1885 = vst [vmem:[%s1832 + $0x1a0] sm:$0xff] %v1820
        %1886 = vst [vmem:[%s1832 + $0x1a8] sm:$0xff] %v1821
        %1887 = vst [vmem:[%s1832 + $0x1b0] sm:$0xff] %v1822
        %1888 = vst [vmem:[%s1832 + $0x1b8] sm:$0xff] %v1823
        %1889 = vst [vmem:[%s1832 + $0x1c0] sm:$0xff] %v1824
        %1890 = vst [vmem:[%s1832 + $0x1c8] sm:$0xff] %v1825
        %1891 = vst [vmem:[%s1832 + $0x1d0] sm:$0xff] %v1826
        %1892 = vst [vmem:[%s1832 + $0x1d8] sm:$0xff] %v1827
        %1893 = vst [vmem:[%s1832 + $0x1e0] sm:$0xff] %v1828
        %1894 = vst [vmem:[%s1832 + $0x1e8] sm:$0xff] %v1829
        %1895 = vst [vmem:[%s1832 + $0x1f0] sm:$0xff] %v1830
        %1896 = vst [vmem:[%s1832 + $0x1f8] sm:$0xff] %v1831
        %v1897 = vld [vmem:[#allocation2] sm:$0xff]
        %v1898 = vld [vmem:[#allocation2 + $0x8] sm:$0xff]
        %v1899 = vld [vmem:[#allocation2 + $0x10] sm:$0xff]
        %v1900 = vld [vmem:[#allocation2 + $0x18] sm:$0xff]
        %v1901 = vld [vmem:[#allocation2 + $0x20] sm:$0xff]
        %v1902 = vld [vmem:[#allocation2 + $0x28] sm:$0xff]
        %v1903 = vld [vmem:[#allocation2 + $0x30] sm:$0xff]
        %v1904 = vld [vmem:[#allocation2 + $0x38] sm:$0xff]
        %v1905 = vld [vmem:[#allocation2 + $0x40] sm:$0xff]
        %v1906 = vld [vmem:[#allocation2 + $0x48] sm:$0xff]
        %v1907 = vld [vmem:[#allocation2 + $0x50] sm:$0xff]
        %v1908 = vld [vmem:[#allocation2 + $0x58] sm:$0xff]
        %v1909 = vld [vmem:[#allocation2 + $0x60] sm:$0xff]
        %v1910 = vld [vmem:[#allocation2 + $0x68] sm:$0xff]
        %v1911 = vld [vmem:[#allocation2 + $0x70] sm:$0xff]
        %v1912 = vld [vmem:[#allocation2 + $0x78] sm:$0xff]
        %v1913 = vld [vmem:[#allocation2 + $0x80] sm:$0xff]
        %v1914 = vld [vmem:[#allocation2 + $0x88] sm:$0xff]
        %v1915 = vld [vmem:[#allocation2 + $0x90] sm:$0xff]
        %v1916 = vld [vmem:[#allocation2 + $0x98] sm:$0xff]
        %v1917 = vld [vmem:[#allocation2 + $0xa0] sm:$0xff]
        %v1918 = vld [vmem:[#allocation2 + $0xa8] sm:$0xff]
        %v1919 = vld [vmem:[#allocation2 + $0xb0] sm:$0xff]
        %v1920 = vld [vmem:[#allocation2 + $0xb8] sm:$0xff]
        %v1921 = vld [vmem:[#allocation2 + $0xc0] sm:$0xff]
        %v1922 = vld [vmem:[#allocation2 + $0xc8] sm:$0xff]
        %v1923 = vld [vmem:[#allocation2 + $0xd0] sm:$0xff]
        %v1924 = vld [vmem:[#allocation2 + $0xd8] sm:$0xff]
        %v1925 = vld [vmem:[#allocation2 + $0xe0] sm:$0xff]
        %v1926 = vld [vmem:[#allocation2 + $0xe8] sm:$0xff]
        %v1927 = vld [vmem:[#allocation2 + $0xf0] sm:$0xff]
        %v1928 = vld [vmem:[#allocation2 + $0xf8] sm:$0xff]
        %v1929 = vld [vmem:[#allocation2 + $0x100] sm:$0xff]
        %v1930 = vld [vmem:[#allocation2 + $0x108] sm:$0xff]
        %v1931 = vld [vmem:[#allocation2 + $0x110] sm:$0xff]
        %v1932 = vld [vmem:[#allocation2 + $0x118] sm:$0xff]
        %v1933 = vld [vmem:[#allocation2 + $0x120] sm:$0xff]
        %v1934 = vld [vmem:[#allocation2 + $0x128] sm:$0xff]
        %v1935 = vld [vmem:[#allocation2 + $0x130] sm:$0xff]
        %v1936 = vld [vmem:[#allocation2 + $0x138] sm:$0xff]
        %v1937 = vld [vmem:[#allocation2 + $0x140] sm:$0xff]
        %v1938 = vld [vmem:[#allocation2 + $0x148] sm:$0xff]
        %v1939 = vld [vmem:[#allocation2 + $0x150] sm:$0xff]
        %v1940 = vld [vmem:[#allocation2 + $0x158] sm:$0xff]
        %v1941 = vld [vmem:[#allocation2 + $0x160] sm:$0xff]
        %v1942 = vld [vmem:[#allocation2 + $0x168] sm:$0xff]
        %v1943 = vld [vmem:[#allocation2 + $0x170] sm:$0xff]
        %v1944 = vld [vmem:[#allocation2 + $0x178] sm:$0xff]
        %v1945 = vld [vmem:[#allocation2 + $0x180] sm:$0xff]
        %v1946 = vld [vmem:[#allocation2 + $0x188] sm:$0xff]
        %v1947 = vld [vmem:[#allocation2 + $0x190] sm:$0xff]
        %v1948 = vld [vmem:[#allocation2 + $0x198] sm:$0xff]
        %v1949 = vld [vmem:[#allocation2 + $0x1a0] sm:$0xff]
        %v1950 = vld [vmem:[#allocation2 + $0x1a8] sm:$0xff]
        %v1951 = vld [vmem:[#allocation2 + $0x1b0] sm:$0xff]
        %v1952 = vld [vmem:[#allocation2 + $0x1b8] sm:$0xff]
        %v1953 = vld [vmem:[#allocation2 + $0x1c0] sm:$0xff]
        %v1954 = vld [vmem:[#allocation2 + $0x1c8] sm:$0xff]
        %v1955 = vld [vmem:[#allocation2 + $0x1d0] sm:$0xff]
        %v1956 = vld [vmem:[#allocation2 + $0x1d8] sm:$0xff]
        %v1957 = vld [vmem:[#allocation2 + $0x1e0] sm:$0xff]
        %v1958 = vld [vmem:[#allocation2 + $0x1e8] sm:$0xff]
        %v1959 = vld [vmem:[#allocation2 + $0x1f0] sm:$0xff]
        %v1960 = vld [vmem:[#allocation2 + $0x1f8] sm:$0xff]
        %s1961 = sld [smem:[#allocation6 + $0x2]]
        %v1962 = vstv %s1961
        %v1963 = vmul.f32 %v1897, %v1962
        %v1964 = vmul.f32 %v1898, %v1962
        %v1965 = vmul.f32 %v1899, %v1962
        %v1966 = vmul.f32 %v1900, %v1962
        %v1967 = vmul.f32 %v1901, %v1962
        %v1968 = vmul.f32 %v1902, %v1962
        %v1969 = vmul.f32 %v1903, %v1962
        %v1970 = vmul.f32 %v1904, %v1962
        %v1971 = vmul.f32 %v1905, %v1962
        %v1972 = vmul.f32 %v1906, %v1962
        %v1973 = vmul.f32 %v1907, %v1962
        %v1974 = vmul.f32 %v1908, %v1962
        %v1975 = vmul.f32 %v1909, %v1962
        %v1976 = vmul.f32 %v1910, %v1962
        %v1977 = vmul.f32 %v1911, %v1962
        %v1978 = vmul.f32 %v1912, %v1962
        %v1979 = vmul.f32 %v1913, %v1962
        %v1980 = vmul.f32 %v1914, %v1962
        %v1981 = vmul.f32 %v1915, %v1962
        %v1982 = vmul.f32 %v1916, %v1962
        %v1983 = vmul.f32 %v1917, %v1962
        %v1984 = vmul.f32 %v1918, %v1962
        %v1985 = vmul.f32 %v1919, %v1962
        %v1986 = vmul.f32 %v1920, %v1962
        %v1987 = vmul.f32 %v1921, %v1962
        %v1988 = vmul.f32 %v1922, %v1962
        %v1989 = vmul.f32 %v1923, %v1962
        %v1990 = vmul.f32 %v1924, %v1962
        %v1991 = vmul.f32 %v1925, %v1962
        %v1992 = vmul.f32 %v1926, %v1962
        %v1993 = vmul.f32 %v1927, %v1962
        %v1994 = vmul.f32 %v1928, %v1962
        %v1995 = vmul.f32 %v1929, %v1962
        %v1996 = vmul.f32 %v1930, %v1962
        %v1997 = vmul.f32 %v1931, %v1962
        %v1998 = vmul.f32 %v1932, %v1962
        %v1999 = vmul.f32 %v1933, %v1962
        %v2000 = vmul.f32 %v1934, %v1962
        %v2001 = vmul.f32 %v1935, %v1962
        %v2002 = vmul.f32 %v1936, %v1962
        %v2003 = vmul.f32 %v1937, %v1962
        %v2004 = vmul.f32 %v1938, %v1962
        %v2005 = vmul.f32 %v1939, %v1962
        %v2006 = vmul.f32 %v1940, %v1962
        %v2007 = vmul.f32 %v1941, %v1962
        %v2008 = vmul.f32 %v1942, %v1962
        %v2009 = vmul.f32 %v1943, %v1962
        %v2010 = vmul.f32 %v1944, %v1962
        %v2011 = vmul.f32 %v1945, %v1962
        %v2012 = vmul.f32 %v1946, %v1962
        %v2013 = vmul.f32 %v1947, %v1962
        %v2014 = vmul.f32 %v1948, %v1962
        %v2015 = vmul.f32 %v1949, %v1962
        %v2016 = vmul.f32 %v1950, %v1962
        %v2017 = vmul.f32 %v1951, %v1962
        %v2018 = vmul.f32 %v1952, %v1962
        %v2019 = vmul.f32 %v1953, %v1962
        %v2020 = vmul.f32 %v1954, %v1962
        %v2021 = vmul.f32 %v1955, %v1962
        %v2022 = vmul.f32 %v1956, %v1962
        %v2023 = vmul.f32 %v1957, %v1962
        %v2024 = vmul.f32 %v1958, %v1962
        %v2025 = vmul.f32 %v1959, %v1962
        %v2026 = vmul.f32 %v1960, %v1962
        %s2027 = scalar_lea.vmem %s273, 1024 [#allocation8]
        %2028 = vst [vmem:[%s2027] sm:$0xff] %v1963
        %2029 = vst [vmem:[%s2027 + $0x8] sm:$0xff] %v1964
        %2030 = vst [vmem:[%s2027 + $0x10] sm:$0xff] %v1965
        %2031 = vst [vmem:[%s2027 + $0x18] sm:$0xff] %v1966
        %2032 = vst [vmem:[%s2027 + $0x20] sm:$0xff] %v1967
        %2033 = vst [vmem:[%s2027 + $0x28] sm:$0xff] %v1968
        %2034 = vst [vmem:[%s2027 + $0x30] sm:$0xff] %v1969
        %2035 = vst [vmem:[%s2027 + $0x38] sm:$0xff] %v1970
        %2036 = vst [vmem:[%s2027 + $0x40] sm:$0xff] %v1971
        %2037 = vst [vmem:[%s2027 + $0x48] sm:$0xff] %v1972
        %2038 = vst [vmem:[%s2027 + $0x50] sm:$0xff] %v1973
        %2039 = vst [vmem:[%s2027 + $0x58] sm:$0xff] %v1974
        %2040 = vst [vmem:[%s2027 + $0x60] sm:$0xff] %v1975
        %2041 = vst [vmem:[%s2027 + $0x68] sm:$0xff] %v1976
        %2042 = vst [vmem:[%s2027 + $0x70] sm:$0xff] %v1977
        %2043 = vst [vmem:[%s2027 + $0x78] sm:$0xff] %v1978
        %2044 = vst [vmem:[%s2027 + $0x80] sm:$0xff] %v1979
        %2045 = vst [vmem:[%s2027 + $0x88] sm:$0xff] %v1980
        %2046 = vst [vmem:[%s2027 + $0x90] sm:$0xff] %v1981
        %2047 = vst [vmem:[%s2027 + $0x98] sm:$0xff] %v1982
        %2048 = vst [vmem:[%s2027 + $0xa0] sm:$0xff] %v1983
        %2049 = vst [vmem:[%s2027 + $0xa8] sm:$0xff] %v1984
        %2050 = vst [vmem:[%s2027 + $0xb0] sm:$0xff] %v1985
        %2051 = vst [vmem:[%s2027 + $0xb8] sm:$0xff] %v1986
        %2052 = vst [vmem:[%s2027 + $0xc0] sm:$0xff] %v1987
        %2053 = vst [vmem:[%s2027 + $0xc8] sm:$0xff] %v1988
        %2054 = vst [vmem:[%s2027 + $0xd0] sm:$0xff] %v1989
        %2055 = vst [vmem:[%s2027 + $0xd8] sm:$0xff] %v1990
        %2056 = vst [vmem:[%s2027 + $0xe0] sm:$0xff] %v1991
        %2057 = vst [vmem:[%s2027 + $0xe8] sm:$0xff] %v1992
        %2058 = vst [vmem:[%s2027 + $0xf0] sm:$0xff] %v1993
        %2059 = vst [vmem:[%s2027 + $0xf8] sm:$0xff] %v1994
        %2060 = vst [vmem:[%s2027 + $0x100] sm:$0xff] %v1995
        %2061 = vst [vmem:[%s2027 + $0x108] sm:$0xff] %v1996
        %2062 = vst [vmem:[%s2027 + $0x110] sm:$0xff] %v1997
        %2063 = vst [vmem:[%s2027 + $0x118] sm:$0xff] %v1998
        %2064 = vst [vmem:[%s2027 + $0x120] sm:$0xff] %v1999
        %2065 = vst [vmem:[%s2027 + $0x128] sm:$0xff] %v2000
        %2066 = vst [vmem:[%s2027 + $0x130] sm:$0xff] %v2001
        %2067 = vst [vmem:[%s2027 + $0x138] sm:$0xff] %v2002
        %2068 = vst [vmem:[%s2027 + $0x140] sm:$0xff] %v2003
        %2069 = vst [vmem:[%s2027 + $0x148] sm:$0xff] %v2004
        %2070 = vst [vmem:[%s2027 + $0x150] sm:$0xff] %v2005
        %2071 = vst [vmem:[%s2027 + $0x158] sm:$0xff] %v2006
        %2072 = vst [vmem:[%s2027 + $0x160] sm:$0xff] %v2007
        %2073 = vst [vmem:[%s2027 + $0x168] sm:$0xff] %v2008
        %2074 = vst [vmem:[%s2027 + $0x170] sm:$0xff] %v2009
        %2075 = vst [vmem:[%s2027 + $0x178] sm:$0xff] %v2010
        %2076 = vst [vmem:[%s2027 + $0x180] sm:$0xff] %v2011
        %2077 = vst [vmem:[%s2027 + $0x188] sm:$0xff] %v2012
        %2078 = vst [vmem:[%s2027 + $0x190] sm:$0xff] %v2013
        %2079 = vst [vmem:[%s2027 + $0x198] sm:$0xff] %v2014
        %2080 = vst [vmem:[%s2027 + $0x1a0] sm:$0xff] %v2015
        %2081 = vst [vmem:[%s2027 + $0x1a8] sm:$0xff] %v2016
        %2082 = vst [vmem:[%s2027 + $0x1b0] sm:$0xff] %v2017
        %2083 = vst [vmem:[%s2027 + $0x1b8] sm:$0xff] %v2018
        %2084 = vst [vmem:[%s2027 + $0x1c0] sm:$0xff] %v2019
        %2085 = vst [vmem:[%s2027 + $0x1c8] sm:$0xff] %v2020
        %2086 = vst [vmem:[%s2027 + $0x1d0] sm:$0xff] %v2021
        %2087 = vst [vmem:[%s2027 + $0x1d8] sm:$0xff] %v2022
        %2088 = vst [vmem:[%s2027 + $0x1e0] sm:$0xff] %v2023
        %2089 = vst [vmem:[%s2027 + $0x1e8] sm:$0xff] %v2024
        %2090 = vst [vmem:[%s2027 + $0x1f0] sm:$0xff] %v2025
        %2091 = vst [vmem:[%s2027 + $0x1f8] sm:$0xff] %v2026
        %v2092 = vld [vmem:[#allocation2] sm:$0xff]
        %v2093 = vld [vmem:[#allocation2 + $0x8] sm:$0xff]
        %v2094 = vld [vmem:[#allocation2 + $0x10] sm:$0xff]
        %v2095 = vld [vmem:[#allocation2 + $0x18] sm:$0xff]
        %v2096 = vld [vmem:[#allocation2 + $0x20] sm:$0xff]
        %v2097 = vld [vmem:[#allocation2 + $0x28] sm:$0xff]
        %v2098 = vld [vmem:[#allocation2 + $0x30] sm:$0xff]
        %v2099 = vld [vmem:[#allocation2 + $0x38] sm:$0xff]
        %v2100 = vld [vmem:[#allocation2 + $0x40] sm:$0xff]
        %v2101 = vld [vmem:[#allocation2 + $0x48] sm:$0xff]
        %v2102 = vld [vmem:[#allocation2 + $0x50] sm:$0xff]
        %v2103 = vld [vmem:[#allocation2 + $0x58] sm:$0xff]
        %v2104 = vld [vmem:[#allocation2 + $0x60] sm:$0xff]
        %v2105 = vld [vmem:[#allocation2 + $0x68] sm:$0xff]
        %v2106 = vld [vmem:[#allocation2 + $0x70] sm:$0xff]
        %v2107 = vld [vmem:[#allocation2 + $0x78] sm:$0xff]
        %v2108 = vld [vmem:[#allocation2 + $0x80] sm:$0xff]
        %v2109 = vld [vmem:[#allocation2 + $0x88] sm:$0xff]
        %v2110 = vld [vmem:[#allocation2 + $0x90] sm:$0xff]
        %v2111 = vld [vmem:[#allocation2 + $0x98] sm:$0xff]
        %v2112 = vld [vmem:[#allocation2 + $0xa0] sm:$0xff]
        %v2113 = vld [vmem:[#allocation2 + $0xa8] sm:$0xff]
        %v2114 = vld [vmem:[#allocation2 + $0xb0] sm:$0xff]
        %v2115 = vld [vmem:[#allocation2 + $0xb8] sm:$0xff]
        %v2116 = vld [vmem:[#allocation2 + $0xc0] sm:$0xff]
        %v2117 = vld [vmem:[#allocation2 + $0xc8] sm:$0xff]
        %v2118 = vld [vmem:[#allocation2 + $0xd0] sm:$0xff]
        %v2119 = vld [vmem:[#allocation2 + $0xd8] sm:$0xff]
        %v2120 = vld [vmem:[#allocation2 + $0xe0] sm:$0xff]
        %v2121 = vld [vmem:[#allocation2 + $0xe8] sm:$0xff]
        %v2122 = vld [vmem:[#allocation2 + $0xf0] sm:$0xff]
        %v2123 = vld [vmem:[#allocation2 + $0xf8] sm:$0xff]
        %v2124 = vld [vmem:[#allocation2 + $0x100] sm:$0xff]
        %v2125 = vld [vmem:[#allocation2 + $0x108] sm:$0xff]
        %v2126 = vld [vmem:[#allocation2 + $0x110] sm:$0xff]
        %v2127 = vld [vmem:[#allocation2 + $0x118] sm:$0xff]
        %v2128 = vld [vmem:[#allocation2 + $0x120] sm:$0xff]
        %v2129 = vld [vmem:[#allocation2 + $0x128] sm:$0xff]
        %v2130 = vld [vmem:[#allocation2 + $0x130] sm:$0xff]
        %v2131 = vld [vmem:[#allocation2 + $0x138] sm:$0xff]
        %v2132 = vld [vmem:[#allocation2 + $0x140] sm:$0xff]
        %v2133 = vld [vmem:[#allocation2 + $0x148] sm:$0xff]
        %v2134 = vld [vmem:[#allocation2 + $0x150] sm:$0xff]
        %v2135 = vld [vmem:[#allocation2 + $0x158] sm:$0xff]
        %v2136 = vld [vmem:[#allocation2 + $0x160] sm:$0xff]
        %v2137 = vld [vmem:[#allocation2 + $0x168] sm:$0xff]
        %v2138 = vld [vmem:[#allocation2 + $0x170] sm:$0xff]
        %v2139 = vld [vmem:[#allocation2 + $0x178] sm:$0xff]
        %v2140 = vld [vmem:[#allocation2 + $0x180] sm:$0xff]
        %v2141 = vld [vmem:[#allocation2 + $0x188] sm:$0xff]
        %v2142 = vld [vmem:[#allocation2 + $0x190] sm:$0xff]
        %v2143 = vld [vmem:[#allocation2 + $0x198] sm:$0xff]
        %v2144 = vld [vmem:[#allocation2 + $0x1a0] sm:$0xff]
        %v2145 = vld [vmem:[#allocation2 + $0x1a8] sm:$0xff]
        %v2146 = vld [vmem:[#allocation2 + $0x1b0] sm:$0xff]
        %v2147 = vld [vmem:[#allocation2 + $0x1b8] sm:$0xff]
        %v2148 = vld [vmem:[#allocation2 + $0x1c0] sm:$0xff]
        %v2149 = vld [vmem:[#allocation2 + $0x1c8] sm:$0xff]
        %v2150 = vld [vmem:[#allocation2 + $0x1d0] sm:$0xff]
        %v2151 = vld [vmem:[#allocation2 + $0x1d8] sm:$0xff]
        %v2152 = vld [vmem:[#allocation2 + $0x1e0] sm:$0xff]
        %v2153 = vld [vmem:[#allocation2 + $0x1e8] sm:$0xff]
        %v2154 = vld [vmem:[#allocation2 + $0x1f0] sm:$0xff]
        %v2155 = vld [vmem:[#allocation2 + $0x1f8] sm:$0xff]
        %s2156 = sld [smem:[#allocation6 + $0x3]]
        %v2157 = vstv %s2156
        %v2158 = vmul.f32 %v2092, %v2157
        %v2159 = vmul.f32 %v2093, %v2157
        %v2160 = vmul.f32 %v2094, %v2157
        %v2161 = vmul.f32 %v2095, %v2157
        %v2162 = vmul.f32 %v2096, %v2157
        %v2163 = vmul.f32 %v2097, %v2157
        %v2164 = vmul.f32 %v2098, %v2157
        %v2165 = vmul.f32 %v2099, %v2157
        %v2166 = vmul.f32 %v2100, %v2157
        %v2167 = vmul.f32 %v2101, %v2157
        %v2168 = vmul.f32 %v2102, %v2157
        %v2169 = vmul.f32 %v2103, %v2157
        %v2170 = vmul.f32 %v2104, %v2157
        %v2171 = vmul.f32 %v2105, %v2157
        %v2172 = vmul.f32 %v2106, %v2157
        %v2173 = vmul.f32 %v2107, %v2157
        %v2174 = vmul.f32 %v2108, %v2157
        %v2175 = vmul.f32 %v2109, %v2157
        %v2176 = vmul.f32 %v2110, %v2157
        %v2177 = vmul.f32 %v2111, %v2157
        %v2178 = vmul.f32 %v2112, %v2157
        %v2179 = vmul.f32 %v2113, %v2157
        %v2180 = vmul.f32 %v2114, %v2157
        %v2181 = vmul.f32 %v2115, %v2157
        %v2182 = vmul.f32 %v2116, %v2157
        %v2183 = vmul.f32 %v2117, %v2157
        %v2184 = vmul.f32 %v2118, %v2157
        %v2185 = vmul.f32 %v2119, %v2157
        %v2186 = vmul.f32 %v2120, %v2157
        %v2187 = vmul.f32 %v2121, %v2157
        %v2188 = vmul.f32 %v2122, %v2157
        %v2189 = vmul.f32 %v2123, %v2157
        %v2190 = vmul.f32 %v2124, %v2157
        %v2191 = vmul.f32 %v2125, %v2157
        %v2192 = vmul.f32 %v2126, %v2157
        %v2193 = vmul.f32 %v2127, %v2157
        %v2194 = vmul.f32 %v2128, %v2157
        %v2195 = vmul.f32 %v2129, %v2157
        %v2196 = vmul.f32 %v2130, %v2157
        %v2197 = vmul.f32 %v2131, %v2157
        %v2198 = vmul.f32 %v2132, %v2157
        %v2199 = vmul.f32 %v2133, %v2157
        %v2200 = vmul.f32 %v2134, %v2157
        %v2201 = vmul.f32 %v2135, %v2157
        %v2202 = vmul.f32 %v2136, %v2157
        %v2203 = vmul.f32 %v2137, %v2157
        %v2204 = vmul.f32 %v2138, %v2157
        %v2205 = vmul.f32 %v2139, %v2157
        %v2206 = vmul.f32 %v2140, %v2157
        %v2207 = vmul.f32 %v2141, %v2157
        %v2208 = vmul.f32 %v2142, %v2157
        %v2209 = vmul.f32 %v2143, %v2157
        %v2210 = vmul.f32 %v2144, %v2157
        %v2211 = vmul.f32 %v2145, %v2157
        %v2212 = vmul.f32 %v2146, %v2157
        %v2213 = vmul.f32 %v2147, %v2157
        %v2214 = vmul.f32 %v2148, %v2157
        %v2215 = vmul.f32 %v2149, %v2157
        %v2216 = vmul.f32 %v2150, %v2157
        %v2217 = vmul.f32 %v2151, %v2157
        %v2218 = vmul.f32 %v2152, %v2157
        %v2219 = vmul.f32 %v2153, %v2157
        %v2220 = vmul.f32 %v2154, %v2157
        %v2221 = vmul.f32 %v2155, %v2157
        %s2222 = scalar_lea.vmem %s273, 1536 [#allocation8]
        %2223 = vst [vmem:[%s2222] sm:$0xff] %v2158
        %2224 = vst [vmem:[%s2222 + $0x8] sm:$0xff] %v2159
        %2225 = vst [vmem:[%s2222 + $0x10] sm:$0xff] %v2160
        %2226 = vst [vmem:[%s2222 + $0x18] sm:$0xff] %v2161
        %2227 = vst [vmem:[%s2222 + $0x20] sm:$0xff] %v2162
        %2228 = vst [vmem:[%s2222 + $0x28] sm:$0xff] %v2163
        %2229 = vst [vmem:[%s2222 + $0x30] sm:$0xff] %v2164
        %2230 = vst [vmem:[%s2222 + $0x38] sm:$0xff] %v2165
        %2231 = vst [vmem:[%s2222 + $0x40] sm:$0xff] %v2166
        %2232 = vst [vmem:[%s2222 + $0x48] sm:$0xff] %v2167
        %2233 = vst [vmem:[%s2222 + $0x50] sm:$0xff] %v2168
        %2234 = vst [vmem:[%s2222 + $0x58] sm:$0xff] %v2169
        %2235 = vst [vmem:[%s2222 + $0x60] sm:$0xff] %v2170
        %2236 = vst [vmem:[%s2222 + $0x68] sm:$0xff] %v2171
        %2237 = vst [vmem:[%s2222 + $0x70] sm:$0xff] %v2172
        %2238 = vst [vmem:[%s2222 + $0x78] sm:$0xff] %v2173
        %2239 = vst [vmem:[%s2222 + $0x80] sm:$0xff] %v2174
        %2240 = vst [vmem:[%s2222 + $0x88] sm:$0xff] %v2175
        %2241 = vst [vmem:[%s2222 + $0x90] sm:$0xff] %v2176
        %2242 = vst [vmem:[%s2222 + $0x98] sm:$0xff] %v2177
        %2243 = vst [vmem:[%s2222 + $0xa0] sm:$0xff] %v2178
        %2244 = vst [vmem:[%s2222 + $0xa8] sm:$0xff] %v2179
        %2245 = vst [vmem:[%s2222 + $0xb0] sm:$0xff] %v2180
        %2246 = vst [vmem:[%s2222 + $0xb8] sm:$0xff] %v2181
        %2247 = vst [vmem:[%s2222 + $0xc0] sm:$0xff] %v2182
        %2248 = vst [vmem:[%s2222 + $0xc8] sm:$0xff] %v2183
        %2249 = vst [vmem:[%s2222 + $0xd0] sm:$0xff] %v2184
        %2250 = vst [vmem:[%s2222 + $0xd8] sm:$0xff] %v2185
        %2251 = vst [vmem:[%s2222 + $0xe0] sm:$0xff] %v2186
        %2252 = vst [vmem:[%s2222 + $0xe8] sm:$0xff] %v2187
        %2253 = vst [vmem:[%s2222 + $0xf0] sm:$0xff] %v2188
        %2254 = vst [vmem:[%s2222 + $0xf8] sm:$0xff] %v2189
        %2255 = vst [vmem:[%s2222 + $0x100] sm:$0xff] %v2190
        %2256 = vst [vmem:[%s2222 + $0x108] sm:$0xff] %v2191
        %2257 = vst [vmem:[%s2222 + $0x110] sm:$0xff] %v2192
        %2258 = vst [vmem:[%s2222 + $0x118] sm:$0xff] %v2193
        %2259 = vst [vmem:[%s2222 + $0x120] sm:$0xff] %v2194
        %2260 = vst [vmem:[%s2222 + $0x128] sm:$0xff] %v2195
        %2261 = vst [vmem:[%s2222 + $0x130] sm:$0xff] %v2196
        %2262 = vst [vmem:[%s2222 + $0x138] sm:$0xff] %v2197
        %2263 = vst [vmem:[%s2222 + $0x140] sm:$0xff] %v2198
        %2264 = vst [vmem:[%s2222 + $0x148] sm:$0xff] %v2199
        %2265 = vst [vmem:[%s2222 + $0x150] sm:$0xff] %v2200
        %2266 = vst [vmem:[%s2222 + $0x158] sm:$0xff] %v2201
        %2267 = vst [vmem:[%s2222 + $0x160] sm:$0xff] %v2202
        %2268 = vst [vmem:[%s2222 + $0x168] sm:$0xff] %v2203
        %2269 = vst [vmem:[%s2222 + $0x170] sm:$0xff] %v2204
        %2270 = vst [vmem:[%s2222 + $0x178] sm:$0xff] %v2205
        %2271 = vst [vmem:[%s2222 + $0x180] sm:$0xff] %v2206
        %2272 = vst [vmem:[%s2222 + $0x188] sm:$0xff] %v2207
        %2273 = vst [vmem:[%s2222 + $0x190] sm:$0xff] %v2208
        %2274 = vst [vmem:[%s2222 + $0x198] sm:$0xff] %v2209
        %2275 = vst [vmem:[%s2222 + $0x1a0] sm:$0xff] %v2210
        %2276 = vst [vmem:[%s2222 + $0x1a8] sm:$0xff] %v2211
        %2277 = vst [vmem:[%s2222 + $0x1b0] sm:$0xff] %v2212
        %2278 = vst [vmem:[%s2222 + $0x1b8] sm:$0xff] %v2213
        %2279 = vst [vmem:[%s2222 + $0x1c0] sm:$0xff] %v2214
        %2280 = vst [vmem:[%s2222 + $0x1c8] sm:$0xff] %v2215
        %2281 = vst [vmem:[%s2222 + $0x1d0] sm:$0xff] %v2216
        %2282 = vst [vmem:[%s2222 + $0x1d8] sm:$0xff] %v2217
        %2283 = vst [vmem:[%s2222 + $0x1e0] sm:$0xff] %v2218
        %2284 = vst [vmem:[%s2222 + $0x1e8] sm:$0xff] %v2219
        %2285 = vst [vmem:[%s2222 + $0x1f0] sm:$0xff] %v2220
        %2286 = vst [vmem:[%s2222 + $0x1f8] sm:$0xff] %v2221
        %s2287 = sand.u32 %s149, 1
        %s2288 = scalar_lea.sflag [#allocation4], %s2287
        %s2289 = sand.u32 %s149, 1
        %s2290 = smul.addr %s2289, 2048
        %s2291 = scalar_lea.vmem [#allocation8], %s2290
        // Predicated region
        $region45: #{tpu_custom_call.1} parent=35 // pred_check
          %p2292 = pneg %p159
        $region46: #{tpu_custom_call.1} parent=35 // pred_check_branch
          %2294 = sbr.rel (%p2292) target = $region48
        $region47: #{tpu_custom_call.1} parent=35 // pred_region
          %s2295 = smul.u32 32, %s26
          %s2296 = smul.u32 2, %s27
          %s2298 = ssub.s32 32768, 32768
          %2299 = vsyncadd %s2288, %s2298
          %s2300 = smul.addr %s2295, 2
          %s2301 = sadd.s32 %s2296, %s2300
          %s2302 = smul.addr %s25, 256
          %s2303 = sadd.s32 %s2301, %s2302
          %s2304 = smul.addr %s2303, 128
          %s2305 = scalar_lea.hbm %s4, %s2304
          %s2306 = sshll.u32 %s2291, 4
          %s2307 = int_to_ptr.vmem [resolvable:$true] %s2306
          %2312 = dma.vmem_to_hbm [thread:$0]  %s2307, 32768, %s2305, %s2288, 256, 256, 16
        $region48: #{tpu_custom_call.1} parent=35 // pred_fallthru
          _
      $region36: #{tpu_custom_call.1} parent=5 // pred_fallthru
        _
      %p2313 = scmp.le.s32.totalorder 2, %s15
      // Predicated region
      $region49: #{tpu_custom_call.1} parent=5 // pred_check
        %p2314 = pneg %p2313
      $region50: #{tpu_custom_call.1} parent=5 // pred_check_branch
        %2316 = sbr.rel (%p2314) target = $region52
      $region51: #{tpu_custom_call.1} parent=5 // pred_region
        %s2317 = ssub.s32 %s15, 2
        // Predicated region
        $region53: #{tpu_custom_call.1} parent=51 // pred_check
          %p2318 = pneg %p165
        $region54: #{tpu_custom_call.1} parent=51 // pred_check_branch
          %2320 = sbr.rel (%p2318) target = $region56
        $region55: #{tpu_custom_call.1} parent=51 // pred_region
          %s2321 = sand.u32 %s150, 1
          %s2322 = scalar_lea.sflag [#allocation4], %s2321
          %s2323 = sand.u32 %s150, 1
          %s2324 = smul.addr %s2323, 2048
          %s2325 = scalar_lea.vmem [#allocation8], %s2324
          %2326 = dma.done %s2322, 32768
        $region56: #{tpu_custom_call.1} parent=51 // pred_fallthru
          _
      $region52: #{tpu_custom_call.1} parent=5 // pred_fallthru
        _
    $region6: #{tpu_custom_call.1} parent=1 // loop_footer
      %s19 = sadd.s32 1, %s15
    $region7: #{tpu_custom_call.1} parent=1 // loop_footer_branch
      %14 = sbr.rel target = $region3
    $region8: #{tpu_custom_call.1} parent=1 // loop_exit
      _
    %2327 = vsyncpa [#allocation4], 1
    %s2328 = scalar_lea.sflag [#allocation4], 1
    %2329 = vsyncpa %s2328, 1
    %2330 = vsyncpa [#allocation5], 1
    %s2331 = scalar_lea.sflag [#allocation5], 1
    %2332 = vsyncpa %s2331, 1
    %2333 = vsyncpa [#allocation7], 1

</llo_original>
